<compile_context>
chip_gen: v7x
topology: tpu7x:2x2x1
jax: 0.10.0
libtpu: 0.0.40
codegen_flags: <defaults>
</compile_context>

<pallas_src>
import math

import jax
import jax.numpy as jnp
from jax import lax
from jax.experimental import pallas as pl
from jax.experimental.pallas import tpu as pltpu

# ----- config (mirrors __C) ---------------------------------------------------
HIDDEN_SIZE = 32
MULTI_HEAD = 4
HIDDEN_SIZE_HEAD = HIDDEN_SIZE // MULTI_HEAD   # 8
DROPOUT_R = 0.1                                # identity at inference
BATCH = 2
SEQ = 8


# ----- fused Pallas kernel ----------------------------------------------------
def mhatt_kernel(v_ref, k_ref, q_ref, bias_ref,
                 wv_ref, wk_ref, wq_ref, wm_ref,
                 bv_ref, bk_ref, bq_ref, bm_ref,
                 o_ref, att_ref):
    """Fused MHAtt forward; the entire working set lives in VMEM.

    v/k/q_ref : (B*S, H) f32
    bias_ref  : (B, S)   f32 additive mask bias (0 for valid, -1e9 for masked)
    w*_ref    : (H, H)   f32, already (in, out) -> kernel computes x @ W
    b*_ref    : (1, H)   f32
    o_ref     : (B*S, H) f32 output
    att_ref   : (B*S, H) f32 VMEM scratch holding per-head attention outputs
    """
    f32 = jnp.float32

    # --- Q/K/V projections: three (B*S,H)@(H,H) MXU matmuls, no HBM round trip.
    v_p = jnp.dot(v_ref[...], wv_ref[...], preferred_element_type=f32) + bv_ref[...]
    k_p = jnp.dot(k_ref[...], wk_ref[...], preferred_element_type=f32) + bk_ref[...]
    q_p = jnp.dot(q_ref[...], wq_ref[...], preferred_element_type=f32) + bq_ref[...]
    bias = bias_ref[...]                               # (B, S)

    scale = 1.0 / math.sqrt(HIDDEN_SIZE_HEAD)

    # --- per-(batch, head) attention.  Heads stay folded in the lane axis of
    #     the (S, H) slabs and are sliced with static column slices; BATCH and
    #     MULTI_HEAD are tiny static ints so these loops fully unroll at trace
    #     time (single kernel, no grid bookkeeping).
    for b in range(BATCH):
        r0 = b * SEQ
        qb = q_p[r0:r0 + SEQ, :]                       # (S, H)
        kb = k_p[r0:r0 + SEQ, :]
        vb = v_p[r0:r0 + SEQ, :]
        bias_b = bias[b:b + 1, :]                      # (1, S): broadcast over queries
        for h in range(MULTI_HEAD):
            c0 = h * HIDDEN_SIZE_HEAD
            qh = qb[:, c0:c0 + HIDDEN_SIZE_HEAD]       # (S, dH)
            kh = kb[:, c0:c0 + HIDDEN_SIZE_HEAD]
            vh = vb[:, c0:c0 + HIDDEN_SIZE_HEAD]

            # scores = qh @ kh.T via NT contraction (no explicit transpose op).
            s = lax.dot_general(qh, kh, (((1,), (1,)), ((), ())),
                                preferred_element_type=f32) * scale
            s = s + bias_b                             # masked keys -> ~ -1e9
            s = s - jnp.max(s, axis=-1, keepdims=True)
            p = jnp.exp(s)
            inv = pl.reciprocal(jnp.sum(p, axis=-1, keepdims=True), approx=False)
            p = p * inv                                # softmax(dim=-1)
            # TODO(synk): attention-map dropout is identity at inference; a
            # train-mode version would use pltpu.prng_seed/prng_random_bits.
            att_ref[r0:r0 + SEQ, c0:c0 + HIDDEN_SIZE_HEAD] = jnp.dot(
                p, vh, preferred_element_type=f32)

    # --- output (merge) projection on the full lane-dense (B*S, H) slab.
    out = jnp.dot(att_ref[...], wm_ref[...], preferred_element_type=f32) + bm_ref[...]
    o_ref[...] = out.astype(o_ref.dtype)


# ----- module wrapper ---------------------------------------------------------
def init_params(key):
    ks = jax.random.split(key, 8)
    scale = 0.05

    def lin(kw, kb):
        # Stored kernel-ready as (in, out); a torch nn.Linear weight (out, in)
        # would be transposed ONCE at conversion time, never inside the kernel.
        w = scale * jax.random.normal(kw, (HIDDEN_SIZE, HIDDEN_SIZE), jnp.float32)
        b = scale * jax.random.normal(kb, (1, HIDDEN_SIZE), jnp.float32)
        return w, b

    wv, bv = lin(ks[0], ks[1])
    wk, bk = lin(ks[2], ks[3])
    wq, bq = lin(ks[4], ks[5])
    wm, bm = lin(ks[6], ks[7])
    return dict(wv=wv, bv=bv, wk=wk, bk=bk, wq=wq, bq=bq, wm=wm, bm=bm)


def mhatt_forward(params, v, k, q, mask):
    """v, k, q: (B, S, H) f32; mask: (B, 1, 1, S) bool (True = masked).

    Returns (B, S, H).  Note: a fully-masked row would yield the same uniform
    softmax as torch's masked_fill(-1e9) reference (all scores ~ -1e9).
    """
    B, S, H = q.shape

    # Additive mask bias, computed once outside the kernel.
    bias = jnp.where(mask.reshape(B, S), jnp.float32(-1e9), jnp.float32(0.0))

    vmem_specs = [pl.BlockSpec(memory_space=pltpu.MemorySpace.VMEM)
                  for _ in range(12)]

    out = pl.pallas_call(
        mhatt_kernel,
        out_shape=jax.ShapeDtypeStruct((B * S, H), jnp.float32),
        in_specs=vmem_specs,
        out_specs=pl.BlockSpec(memory_space=pltpu.MemorySpace.VMEM),
        scratch_shapes=[pltpu.VMEM((B * S, H), jnp.float32)],
    )(
        v.reshape(B * S, H), k.reshape(B * S, H), q.reshape(B * S, H), bias,
        params["wv"], params["wk"], params["wq"], params["wm"],
        params["bv"], params["bk"], params["bq"], params["bm"],
    )
    return out.reshape(B, S, H)


# ----- pure-JAX reference for verification ------------------------------------
def mhatt_reference(params, v, k, q, mask):
    B, S, H = q.shape
    lin = lambda x, w, b: x @ w + b        # weights already (in, out)

    def split_heads(x):
        return x.reshape(B, S, MULTI_HEAD, HIDDEN_SIZE_HEAD).transpose(0, 2, 1, 3)

    vh = split_heads(lin(v, params["wv"], params["bv"]))
    kh = split_heads(lin(k, params["wk"], params["bk"]))
    qh = split_heads(lin(q, params["wq"], params["bq"]))
    scores = jnp.einsum("bhqd,bhkd->bhqk", qh, kh) / math.sqrt(HIDDEN_SIZE_HEAD)
    scores = jnp.where(mask, -1e9, scores)             # torch masked_fill semantics
    p = jax.nn.softmax(scores, axis=-1)
    atted = jnp.einsum("bhqk,bhkd->bhqd", p, vh)
    atted = atted.transpose(0, 2, 1, 3).reshape(B, S, H)
    return lin(atted, params["wm"], params["bm"])


# ----- main --------------------------------------------------------------------
if __name__ == "__main__":
    key = jax.random.PRNGKey(0)
    k_param, k_v, k_k, k_q = jax.random.split(key, 4)

    params = init_params(k_param)

    v = jax.random.normal(k_v, (BATCH, SEQ, HIDDEN_SIZE), jnp.float32)
    k = jax.random.normal(k_k, (BATCH, SEQ, HIDDEN_SIZE), jnp.float32)
    q = jax.random.normal(k_q, (BATCH, SEQ, HIDDEN_SIZE), jnp.float32)

    # key-padding-style mask: True = masked.  batch 0 fully valid, batch 1 has
    # the last 3 positions masked.
    lengths = jnp.array([SEQ, SEQ - 3])
    pos = jnp.arange(SEQ)
    mask = (pos[None, :] >= lengths[:, None]).reshape(BATCH, 1, 1, SEQ)

    out = mhatt_forward(params, v, k, q, mask)
    out = jax.block_until_ready(out)

    ref = mhatt_reference(params, v, k, q, mask)
    assert out.shape == (BATCH, SEQ, HIDDEN_SIZE)
    assert jnp.allclose(out, ref, atol=1e-4, rtol=1e-4), "mismatch vs reference"

    print("KERNEL_OK")
</pallas_src>

<mosaic_0001>
module attributes {stable_mosaic.version = 11 : i64} {
  func.func @mhatt_kernel(%arg0: memref<16x32xf32, #tpu.memory_space<vmem>>, %arg1: memref<16x32xf32, #tpu.memory_space<vmem>>, %arg2: memref<16x32xf32, #tpu.memory_space<vmem>>, %arg3: memref<2x8xf32, #tpu.memory_space<vmem>>, %arg4: memref<32x32xf32, #tpu.memory_space<vmem>>, %arg5: memref<32x32xf32, #tpu.memory_space<vmem>>, %arg6: memref<32x32xf32, #tpu.memory_space<vmem>>, %arg7: memref<32x32xf32, #tpu.memory_space<vmem>>, %arg8: memref<1x32xf32, #tpu.memory_space<vmem>>, %arg9: memref<1x32xf32, #tpu.memory_space<vmem>>, %arg10: memref<1x32xf32, #tpu.memory_space<vmem>>, %arg11: memref<1x32xf32, #tpu.memory_space<vmem>>, %arg12: memref<16x32xf32, #tpu.memory_space<vmem>>, %arg13: memref<16x32xf32, #tpu.memory_space<vmem>>) attributes {dimension_semantics = [], scalar_prefetch = 0 : i64, scratch_operands = 1 : i64, tpu.core_type = #tpu.core_type<tc>} {
    %c0 = arith.constant 0 : index
    %c0_0 = arith.constant 0 : index
    %0 = vector.load %arg0[%c0, %c0_0] : memref<16x32xf32, #tpu.memory_space<vmem>>, vector<16x32xf32>
    %c0_1 = arith.constant 0 : index
    %c0_2 = arith.constant 0 : index
    %1 = vector.load %arg4[%c0_1, %c0_2] : memref<32x32xf32, #tpu.memory_space<vmem>>, vector<32x32xf32>
    %cst = arith.constant dense<0.000000e+00> : vector<16x32xf32>
    %2 = tpu.matmul %0, %1, %cst {dimension_numbers = #tpu.dot_dimension_numbers<[1], [0], [0], [1], [0, 0, 1, 1], [], []>} : vector<16x32xf32>, vector<32x32xf32>, vector<16x32xf32> -> vector<16x32xf32>
    %c0_3 = arith.constant 0 : index
    %c0_4 = arith.constant 0 : index
    %3 = vector.load %arg8[%c0_3, %c0_4] : memref<1x32xf32, #tpu.memory_space<vmem>>, vector<1x32xf32>
    %4 = vector.broadcast %3 : vector<1x32xf32> to vector<16x32xf32>
    %5 = arith.addf %2, %4 : vector<16x32xf32>
    %c0_5 = arith.constant 0 : index
    %c0_6 = arith.constant 0 : index
    %6 = vector.load %arg1[%c0_5, %c0_6] : memref<16x32xf32, #tpu.memory_space<vmem>>, vector<16x32xf32>
    %c0_7 = arith.constant 0 : index
    %c0_8 = arith.constant 0 : index
    %7 = vector.load %arg5[%c0_7, %c0_8] : memref<32x32xf32, #tpu.memory_space<vmem>>, vector<32x32xf32>
    %cst_9 = arith.constant dense<0.000000e+00> : vector<16x32xf32>
    %8 = tpu.matmul %6, %7, %cst_9 {dimension_numbers = #tpu.dot_dimension_numbers<[1], [0], [0], [1], [0, 0, 1, 1], [], []>} : vector<16x32xf32>, vector<32x32xf32>, vector<16x32xf32> -> vector<16x32xf32>
    %c0_10 = arith.constant 0 : index
    %c0_11 = arith.constant 0 : index
    %9 = vector.load %arg9[%c0_10, %c0_11] : memref<1x32xf32, #tpu.memory_space<vmem>>, vector<1x32xf32>
    %10 = vector.broadcast %9 : vector<1x32xf32> to vector<16x32xf32>
    %11 = arith.addf %8, %10 : vector<16x32xf32>
    %c0_12 = arith.constant 0 : index
    %c0_13 = arith.constant 0 : index
    %12 = vector.load %arg2[%c0_12, %c0_13] : memref<16x32xf32, #tpu.memory_space<vmem>>, vector<16x32xf32>
    %c0_14 = arith.constant 0 : index
    %c0_15 = arith.constant 0 : index
    %13 = vector.load %arg6[%c0_14, %c0_15] : memref<32x32xf32, #tpu.memory_space<vmem>>, vector<32x32xf32>
    %cst_16 = arith.constant dense<0.000000e+00> : vector<16x32xf32>
    %14 = tpu.matmul %12, %13, %cst_16 {dimension_numbers = #tpu.dot_dimension_numbers<[1], [0], [0], [1], [0, 0, 1, 1], [], []>} : vector<16x32xf32>, vector<32x32xf32>, vector<16x32xf32> -> vector<16x32xf32>
    %c0_17 = arith.constant 0 : index
    %c0_18 = arith.constant 0 : index
    %15 = vector.load %arg10[%c0_17, %c0_18] : memref<1x32xf32, #tpu.memory_space<vmem>>, vector<1x32xf32>
    %16 = vector.broadcast %15 : vector<1x32xf32> to vector<16x32xf32>
    %17 = arith.addf %14, %16 : vector<16x32xf32>
    %c0_19 = arith.constant 0 : index
    %c0_20 = arith.constant 0 : index
    %18 = vector.load %arg3[%c0_19, %c0_20] : memref<2x8xf32, #tpu.memory_space<vmem>>, vector<2x8xf32>
    %19 = vector.extract_strided_slice %17 {offsets = [0, 0], sizes = [8, 32], strides = [1, 1]} : vector<16x32xf32> to vector<8x32xf32>
    %20 = vector.extract_strided_slice %11 {offsets = [0, 0], sizes = [8, 32], strides = [1, 1]} : vector<16x32xf32> to vector<8x32xf32>
    %21 = vector.extract_strided_slice %5 {offsets = [0, 0], sizes = [8, 32], strides = [1, 1]} : vector<16x32xf32> to vector<8x32xf32>
    %22 = vector.extract_strided_slice %18 {offsets = [0, 0], sizes = [1, 8], strides = [1, 1]} : vector<2x8xf32> to vector<1x8xf32>
    %23 = vector.extract_strided_slice %19 {offsets = [0, 0], sizes = [8, 8], strides = [1, 1]} : vector<8x32xf32> to vector<8x8xf32>
    %24 = vector.extract_strided_slice %20 {offsets = [0, 0], sizes = [8, 8], strides = [1, 1]} : vector<8x32xf32> to vector<8x8xf32>
    %25 = vector.extract_strided_slice %21 {offsets = [0, 0], sizes = [8, 8], strides = [1, 1]} : vector<8x32xf32> to vector<8x8xf32>
    %cst_21 = arith.constant dense<0.000000e+00> : vector<8x8xf32>
    %26 = tpu.matmul %23, %24, %cst_21 {dimension_numbers = #tpu.dot_dimension_numbers<[1], [1], [0], [0], [0, 0, 1, 0], [], []>} : vector<8x8xf32>, vector<8x8xf32>, vector<8x8xf32> -> vector<8x8xf32>
    %cst_22 = arith.constant 0.353553385 : f32
    %27 = vector.broadcast %cst_22 : f32 to vector<8x8xf32>
    %28 = arith.mulf %26, %27 : vector<8x8xf32>
    %29 = vector.broadcast %22 : vector<1x8xf32> to vector<8x8xf32>
    %30 = arith.addf %28, %29 : vector<8x8xf32>
    %cst_23 = arith.constant dense<0xFF800000> : vector<8xf32>
    %31 = vector.multi_reduction <maximumf>, %30, %cst_23 [1] : vector<8x8xf32> to vector<8xf32>
    %32 = vector.shape_cast %31 : vector<8xf32> to vector<8x1xf32>
    %33 = vector.broadcast %32 : vector<8x1xf32> to vector<8x8xf32>
    %34 = arith.subf %30, %33 : vector<8x8xf32>
    %35 = math.exp %34 : vector<8x8xf32>
    %cst_24 = arith.constant dense<0.000000e+00> : vector<8xf32>
    %36 = vector.multi_reduction <add>, %35, %cst_24 [1] : vector<8x8xf32> to vector<8xf32>
    %37 = vector.shape_cast %36 : vector<8xf32> to vector<8x1xf32>
    %38 = tpu.reciprocal %37 : vector<8x1xf32> -> vector<8x1xf32>
    %39 = vector.broadcast %38 : vector<8x1xf32> to vector<8x8xf32>
    %40 = arith.mulf %35, %39 : vector<8x8xf32>
    %cst_25 = arith.constant dense<0.000000e+00> : vector<8x8xf32>
    %41 = tpu.matmul %40, %25, %cst_25 {dimension_numbers = #tpu.dot_dimension_numbers<[1], [0], [0], [1], [0, 0, 1, 1], [], []>} : vector<8x8xf32>, vector<8x8xf32>, vector<8x8xf32> -> vector<8x8xf32>
    %c0_26 = arith.constant 0 : index
    %c0_27 = arith.constant 0 : index
    %42 = vector.load %arg13[%c0_26, %c0_27] : memref<16x32xf32, #tpu.memory_space<vmem>>, vector<8x8xf32>
    tpu.vector_store %arg13[%c0_26, %c0_27], %41 {strides = array<i32>} : memref<16x32xf32, #tpu.memory_space<vmem>>, vector<8x8xf32>,
    %43 = vector.extract_strided_slice %19 {offsets = [0, 8], sizes = [8, 8], strides = [1, 1]} : vector<8x32xf32> to vector<8x8xf32>
    %44 = vector.extract_strided_slice %20 {offsets = [0, 8], sizes = [8, 8], strides = [1, 1]} : vector<8x32xf32> to vector<8x8xf32>
    %45 = vector.extract_strided_slice %21 {offsets = [0, 8], sizes = [8, 8], strides = [1, 1]} : vector<8x32xf32> to vector<8x8xf32>
    %cst_28 = arith.constant dense<0.000000e+00> : vector<8x8xf32>
    %46 = tpu.matmul %43, %44, %cst_28 {dimension_numbers = #tpu.dot_dimension_numbers<[1], [1], [0], [0], [0, 0, 1, 0], [], []>} : vector<8x8xf32>, vector<8x8xf32>, vector<8x8xf32> -> vector<8x8xf32>
    %cst_29 = arith.constant 0.353553385 : f32
    %47 = vector.broadcast %cst_29 : f32 to vector<8x8xf32>
    %48 = arith.mulf %46, %47 : vector<8x8xf32>
    %49 = vector.broadcast %22 : vector<1x8xf32> to vector<8x8xf32>
    %50 = arith.addf %48, %49 : vector<8x8xf32>
    %cst_30 = arith.constant dense<0xFF800000> : vector<8xf32>
    %51 = vector.multi_reduction <maximumf>, %50, %cst_30 [1] : vector<8x8xf32> to vector<8xf32>
    %52 = vector.shape_cast %51 : vector<8xf32> to vector<8x1xf32>
    %53 = vector.broadcast %52 : vector<8x1xf32> to vector<8x8xf32>
    %54 = arith.subf %50, %53 : vector<8x8xf32>
    %55 = math.exp %54 : vector<8x8xf32>
    %cst_31 = arith.constant dense<0.000000e+00> : vector<8xf32>
    %56 = vector.multi_reduction <add>, %55, %cst_31 [1] : vector<8x8xf32> to vector<8xf32>
    %57 = vector.shape_cast %56 : vector<8xf32> to vector<8x1xf32>
    %58 = tpu.reciprocal %57 : vector<8x1xf32> -> vector<8x1xf32>
    %59 = vector.broadcast %58 : vector<8x1xf32> to vector<8x8xf32>
    %60 = arith.mulf %55, %59 : vector<8x8xf32>
    %cst_32 = arith.constant dense<0.000000e+00> : vector<8x8xf32>
    %61 = tpu.matmul %60, %45, %cst_32 {dimension_numbers = #tpu.dot_dimension_numbers<[1], [0], [0], [1], [0, 0, 1, 1], [], []>} : vector<8x8xf32>, vector<8x8xf32>, vector<8x8xf32> -> vector<8x8xf32>
    %c0_33 = arith.constant 0 : index
    %c8 = arith.constant 8 : index
    %62 = vector.load %arg13[%c0_33, %c8] : memref<16x32xf32, #tpu.memory_space<vmem>>, vector<8x8xf32>
    tpu.vector_store %arg13[%c0_33, %c8], %61 {strides = array<i32>} : memref<16x32xf32, #tpu.memory_space<vmem>>, vector<8x8xf32>,
    %63 = vector.extract_strided_slice %19 {offsets = [0, 16], sizes = [8, 8], strides = [1, 1]} : vector<8x32xf32> to vector<8x8xf32>
    %64 = vector.extract_strided_slice %20 {offsets = [0, 16], sizes = [8, 8], strides = [1, 1]} : vector<8x32xf32> to vector<8x8xf32>
    %65 = vector.extract_strided_slice %21 {offsets = [0, 16], sizes = [8, 8], strides = [1, 1]} : vector<8x32xf32> to vector<8x8xf32>
    %cst_34 = arith.constant dense<0.000000e+00> : vector<8x8xf32>
    %66 = tpu.matmul %63, %64, %cst_34 {dimension_numbers = #tpu.dot_dimension_numbers<[1], [1], [0], [0], [0, 0, 1, 0], [], []>} : vector<8x8xf32>, vector<8x8xf32>, vector<8x8xf32> -> vector<8x8xf32>
    %cst_35 = arith.constant 0.353553385 : f32
    %67 = vector.broadcast %cst_35 : f32 to vector<8x8xf32>
    %68 = arith.mulf %66, %67 : vector<8x8xf32>
    %69 = vector.broadcast %22 : vector<1x8xf32> to vector<8x8xf32>
    %70 = arith.addf %68, %69 : vector<8x8xf32>
    %cst_36 = arith.constant dense<0xFF800000> : vector<8xf32>
    %71 = vector.multi_reduction <maximumf>, %70, %cst_36 [1] : vector<8x8xf32> to vector<8xf32>
    %72 = vector.shape_cast %71 : vector<8xf32> to vector<8x1xf32>
    %73 = vector.broadcast %72 : vector<8x1xf32> to vector<8x8xf32>
    %74 = arith.subf %70, %73 : vector<8x8xf32>
    %75 = math.exp %74 : vector<8x8xf32>
    %cst_37 = arith.constant dense<0.000000e+00> : vector<8xf32>
    %76 = vector.multi_reduction <add>, %75, %cst_37 [1] : vector<8x8xf32> to vector<8xf32>
    %77 = vector.shape_cast %76 : vector<8xf32> to vector<8x1xf32>
    %78 = tpu.reciprocal %77 : vector<8x1xf32> -> vector<8x1xf32>
    %79 = vector.broadcast %78 : vector<8x1xf32> to vector<8x8xf32>
    %80 = arith.mulf %75, %79 : vector<8x8xf32>
    %cst_38 = arith.constant dense<0.000000e+00> : vector<8x8xf32>
    %81 = tpu.matmul %80, %65, %cst_38 {dimension_numbers = #tpu.dot_dimension_numbers<[1], [0], [0], [1], [0, 0, 1, 1], [], []>} : vector<8x8xf32>, vector<8x8xf32>, vector<8x8xf32> -> vector<8x8xf32>
    %c0_39 = arith.constant 0 : index
    %c16 = arith.constant 16 : index
    %82 = vector.load %arg13[%c0_39, %c16] : memref<16x32xf32, #tpu.memory_space<vmem>>, vector<8x8xf32>
    tpu.vector_store %arg13[%c0_39, %c16], %81 {strides = array<i32>} : memref<16x32xf32, #tpu.memory_space<vmem>>, vector<8x8xf32>,
    %83 = vector.extract_strided_slice %19 {offsets = [0, 24], sizes = [8, 8], strides = [1, 1]} : vector<8x32xf32> to vector<8x8xf32>
    %84 = vector.extract_strided_slice %20 {offsets = [0, 24], sizes = [8, 8], strides = [1, 1]} : vector<8x32xf32> to vector<8x8xf32>
    %85 = vector.extract_strided_slice %21 {offsets = [0, 24], sizes = [8, 8], strides = [1, 1]} : vector<8x32xf32> to vector<8x8xf32>
    %cst_40 = arith.constant dense<0.000000e+00> : vector<8x8xf32>
    %86 = tpu.matmul %83, %84, %cst_40 {dimension_numbers = #tpu.dot_dimension_numbers<[1], [1], [0], [0], [0, 0, 1, 0], [], []>} : vector<8x8xf32>, vector<8x8xf32>, vector<8x8xf32> -> vector<8x8xf32>
    %cst_41 = arith.constant 0.353553385 : f32
    %87 = vector.broadcast %cst_41 : f32 to vector<8x8xf32>
    %88 = arith.mulf %86, %87 : vector<8x8xf32>
    %89 = vector.broadcast %22 : vector<1x8xf32> to vector<8x8xf32>
    %90 = arith.addf %88, %89 : vector<8x8xf32>
    %cst_42 = arith.constant dense<0xFF800000> : vector<8xf32>
    %91 = vector.multi_reduction <maximumf>, %90, %cst_42 [1] : vector<8x8xf32> to vector<8xf32>
    %92 = vector.shape_cast %91 : vector<8xf32> to vector<8x1xf32>
    %93 = vector.broadcast %92 : vector<8x1xf32> to vector<8x8xf32>
    %94 = arith.subf %90, %93 : vector<8x8xf32>
    %95 = math.exp %94 : vector<8x8xf32>
    %cst_43 = arith.constant dense<0.000000e+00> : vector<8xf32>
    %96 = vector.multi_reduction <add>, %95, %cst_43 [1] : vector<8x8xf32> to vector<8xf32>
    %97 = vector.shape_cast %96 : vector<8xf32> to vector<8x1xf32>
    %98 = tpu.reciprocal %97 : vector<8x1xf32> -> vector<8x1xf32>
    %99 = vector.broadcast %98 : vector<8x1xf32> to vector<8x8xf32>
    %100 = arith.mulf %95, %99 : vector<8x8xf32>
    %cst_44 = arith.constant dense<0.000000e+00> : vector<8x8xf32>
    %101 = tpu.matmul %100, %85, %cst_44 {dimension_numbers = #tpu.dot_dimension_numbers<[1], [0], [0], [1], [0, 0, 1, 1], [], []>} : vector<8x8xf32>, vector<8x8xf32>, vector<8x8xf32> -> vector<8x8xf32>
    %c0_45 = arith.constant 0 : index
    %c24 = arith.constant 24 : index
    %102 = vector.load %arg13[%c0_45, %c24] : memref<16x32xf32, #tpu.memory_space<vmem>>, vector<8x8xf32>
    tpu.vector_store %arg13[%c0_45, %c24], %101 {strides = array<i32>} : memref<16x32xf32, #tpu.memory_space<vmem>>, vector<8x8xf32>,
    %103 = vector.extract_strided_slice %17 {offsets = [8, 0], sizes = [8, 32], strides = [1, 1]} : vector<16x32xf32> to vector<8x32xf32>
    %104 = vector.extract_strided_slice %11 {offsets = [8, 0], sizes = [8, 32], strides = [1, 1]} : vector<16x32xf32> to vector<8x32xf32>
    %105 = vector.extract_strided_slice %5 {offsets = [8, 0], sizes = [8, 32], strides = [1, 1]} : vector<16x32xf32> to vector<8x32xf32>
    %106 = vector.extract_strided_slice %18 {offsets = [1, 0], sizes = [1, 8], strides = [1, 1]} : vector<2x8xf32> to vector<1x8xf32>
    %107 = vector.extract_strided_slice %103 {offsets = [0, 0], sizes = [8, 8], strides = [1, 1]} : vector<8x32xf32> to vector<8x8xf32>
    %108 = vector.extract_strided_slice %104 {offsets = [0, 0], sizes = [8, 8], strides = [1, 1]} : vector<8x32xf32> to vector<8x8xf32>
    %109 = vector.extract_strided_slice %105 {offsets = [0, 0], sizes = [8, 8], strides = [1, 1]} : vector<8x32xf32> to vector<8x8xf32>
    %cst_46 = arith.constant dense<0.000000e+00> : vector<8x8xf32>
    %110 = tpu.matmul %107, %108, %cst_46 {dimension_numbers = #tpu.dot_dimension_numbers<[1], [1], [0], [0], [0, 0, 1, 0], [], []>} : vector<8x8xf32>, vector<8x8xf32>, vector<8x8xf32> -> vector<8x8xf32>
    %cst_47 = arith.constant 0.353553385 : f32
    %111 = vector.broadcast %cst_47 : f32 to vector<8x8xf32>
    %112 = arith.mulf %110, %111 : vector<8x8xf32>
    %113 = vector.broadcast %106 : vector<1x8xf32> to vector<8x8xf32>
    %114 = arith.addf %112, %113 : vector<8x8xf32>
    %cst_48 = arith.constant dense<0xFF800000> : vector<8xf32>
    %115 = vector.multi_reduction <maximumf>, %114, %cst_48 [1] : vector<8x8xf32> to vector<8xf32>
    %116 = vector.shape_cast %115 : vector<8xf32> to vector<8x1xf32>
    %117 = vector.broadcast %116 : vector<8x1xf32> to vector<8x8xf32>
    %118 = arith.subf %114, %117 : vector<8x8xf32>
    %119 = math.exp %118 : vector<8x8xf32>
    %cst_49 = arith.constant dense<0.000000e+00> : vector<8xf32>
    %120 = vector.multi_reduction <add>, %119, %cst_49 [1] : vector<8x8xf32> to vector<8xf32>
    %121 = vector.shape_cast %120 : vector<8xf32> to vector<8x1xf32>
    %122 = tpu.reciprocal %121 : vector<8x1xf32> -> vector<8x1xf32>
    %123 = vector.broadcast %122 : vector<8x1xf32> to vector<8x8xf32>
    %124 = arith.mulf %119, %123 : vector<8x8xf32>
    %cst_50 = arith.constant dense<0.000000e+00> : vector<8x8xf32>
    %125 = tpu.matmul %124, %109, %cst_50 {dimension_numbers = #tpu.dot_dimension_numbers<[1], [0], [0], [1], [0, 0, 1, 1], [], []>} : vector<8x8xf32>, vector<8x8xf32>, vector<8x8xf32> -> vector<8x8xf32>
    %c8_51 = arith.constant 8 : index
    %c0_52 = arith.constant 0 : index
    %126 = vector.load %arg13[%c8_51, %c0_52] : memref<16x32xf32, #tpu.memory_space<vmem>>, vector<8x8xf32>
    tpu.vector_store %arg13[%c8_51, %c0_52], %125 {strides = array<i32>} : memref<16x32xf32, #tpu.memory_space<vmem>>, vector<8x8xf32>,
    %127 = vector.extract_strided_slice %103 {offsets = [0, 8], sizes = [8, 8], strides = [1, 1]} : vector<8x32xf32> to vector<8x8xf32>
    %128 = vector.extract_strided_slice %104 {offsets = [0, 8], sizes = [8, 8], strides = [1, 1]} : vector<8x32xf32> to vector<8x8xf32>
    %129 = vector.extract_strided_slice %105 {offsets = [0, 8], sizes = [8, 8], strides = [1, 1]} : vector<8x32xf32> to vector<8x8xf32>
    %cst_53 = arith.constant dense<0.000000e+00> : vector<8x8xf32>
    %130 = tpu.matmul %127, %128, %cst_53 {dimension_numbers = #tpu.dot_dimension_numbers<[1], [1], [0], [0], [0, 0, 1, 0], [], []>} : vector<8x8xf32>, vector<8x8xf32>, vector<8x8xf32> -> vector<8x8xf32>
    %cst_54 = arith.constant 0.353553385 : f32
    %131 = vector.broadcast %cst_54 : f32 to vector<8x8xf32>
    %132 = arith.mulf %130, %131 : vector<8x8xf32>
    %133 = vector.broadcast %106 : vector<1x8xf32> to vector<8x8xf32>
    %134 = arith.addf %132, %133 : vector<8x8xf32>
    %cst_55 = arith.constant dense<0xFF800000> : vector<8xf32>
    %135 = vector.multi_reduction <maximumf>, %134, %cst_55 [1] : vector<8x8xf32> to vector<8xf32>
    %136 = vector.shape_cast %135 : vector<8xf32> to vector<8x1xf32>
    %137 = vector.broadcast %136 : vector<8x1xf32> to vector<8x8xf32>
    %138 = arith.subf %134, %137 : vector<8x8xf32>
    %139 = math.exp %138 : vector<8x8xf32>
    %cst_56 = arith.constant dense<0.000000e+00> : vector<8xf32>
    %140 = vector.multi_reduction <add>, %139, %cst_56 [1] : vector<8x8xf32> to vector<8xf32>
    %141 = vector.shape_cast %140 : vector<8xf32> to vector<8x1xf32>
    %142 = tpu.reciprocal %141 : vector<8x1xf32> -> vector<8x1xf32>
    %143 = vector.broadcast %142 : vector<8x1xf32> to vector<8x8xf32>
    %144 = arith.mulf %139, %143 : vector<8x8xf32>
    %cst_57 = arith.constant dense<0.000000e+00> : vector<8x8xf32>
    %145 = tpu.matmul %144, %129, %cst_57 {dimension_numbers = #tpu.dot_dimension_numbers<[1], [0], [0], [1], [0, 0, 1, 1], [], []>} : vector<8x8xf32>, vector<8x8xf32>, vector<8x8xf32> -> vector<8x8xf32>
    %c8_58 = arith.constant 8 : index
    %c8_59 = arith.constant 8 : index
    %146 = vector.load %arg13[%c8_58, %c8_59] : memref<16x32xf32, #tpu.memory_space<vmem>>, vector<8x8xf32>
    tpu.vector_store %arg13[%c8_58, %c8_59], %145 {strides = array<i32>} : memref<16x32xf32, #tpu.memory_space<vmem>>, vector<8x8xf32>,
    %147 = vector.extract_strided_slice %103 {offsets = [0, 16], sizes = [8, 8], strides = [1, 1]} : vector<8x32xf32> to vector<8x8xf32>
    %148 = vector.extract_strided_slice %104 {offsets = [0, 16], sizes = [8, 8], strides = [1, 1]} : vector<8x32xf32> to vector<8x8xf32>
    %149 = vector.extract_strided_slice %105 {offsets = [0, 16], sizes = [8, 8], strides = [1, 1]} : vector<8x32xf32> to vector<8x8xf32>
    %cst_60 = arith.constant dense<0.000000e+00> : vector<8x8xf32>
    %150 = tpu.matmul %147, %148, %cst_60 {dimension_numbers = #tpu.dot_dimension_numbers<[1], [1], [0], [0], [0, 0, 1, 0], [], []>} : vector<8x8xf32>, vector<8x8xf32>, vector<8x8xf32> -> vector<8x8xf32>
    %cst_61 = arith.constant 0.353553385 : f32
    %151 = vector.broadcast %cst_61 : f32 to vector<8x8xf32>
    %152 = arith.mulf %150, %151 : vector<8x8xf32>
    %153 = vector.broadcast %106 : vector<1x8xf32> to vector<8x8xf32>
    %154 = arith.addf %152, %153 : vector<8x8xf32>
    %cst_62 = arith.constant dense<0xFF800000> : vector<8xf32>
    %155 = vector.multi_reduction <maximumf>, %154, %cst_62 [1] : vector<8x8xf32> to vector<8xf32>
    %156 = vector.shape_cast %155 : vector<8xf32> to vector<8x1xf32>
    %157 = vector.broadcast %156 : vector<8x1xf32> to vector<8x8xf32>
    %158 = arith.subf %154, %157 : vector<8x8xf32>
    %159 = math.exp %158 : vector<8x8xf32>
    %cst_63 = arith.constant dense<0.000000e+00> : vector<8xf32>
    %160 = vector.multi_reduction <add>, %159, %cst_63 [1] : vector<8x8xf32> to vector<8xf32>
    %161 = vector.shape_cast %160 : vector<8xf32> to vector<8x1xf32>
    %162 = tpu.reciprocal %161 : vector<8x1xf32> -> vector<8x1xf32>
    %163 = vector.broadcast %162 : vector<8x1xf32> to vector<8x8xf32>
    %164 = arith.mulf %159, %163 : vector<8x8xf32>
    %cst_64 = arith.constant dense<0.000000e+00> : vector<8x8xf32>
    %165 = tpu.matmul %164, %149, %cst_64 {dimension_numbers = #tpu.dot_dimension_numbers<[1], [0], [0], [1], [0, 0, 1, 1], [], []>} : vector<8x8xf32>, vector<8x8xf32>, vector<8x8xf32> -> vector<8x8xf32>
    %c8_65 = arith.constant 8 : index
    %c16_66 = arith.constant 16 : index
    %166 = vector.load %arg13[%c8_65, %c16_66] : memref<16x32xf32, #tpu.memory_space<vmem>>, vector<8x8xf32>
    tpu.vector_store %arg13[%c8_65, %c16_66], %165 {strides = array<i32>} : memref<16x32xf32, #tpu.memory_space<vmem>>, vector<8x8xf32>,
    %167 = vector.extract_strided_slice %103 {offsets = [0, 24], sizes = [8, 8], strides = [1, 1]} : vector<8x32xf32> to vector<8x8xf32>
    %168 = vector.extract_strided_slice %104 {offsets = [0, 24], sizes = [8, 8], strides = [1, 1]} : vector<8x32xf32> to vector<8x8xf32>
    %169 = vector.extract_strided_slice %105 {offsets = [0, 24], sizes = [8, 8], strides = [1, 1]} : vector<8x32xf32> to vector<8x8xf32>
    %cst_67 = arith.constant dense<0.000000e+00> : vector<8x8xf32>
    %170 = tpu.matmul %167, %168, %cst_67 {dimension_numbers = #tpu.dot_dimension_numbers<[1], [1], [0], [0], [0, 0, 1, 0], [], []>} : vector<8x8xf32>, vector<8x8xf32>, vector<8x8xf32> -> vector<8x8xf32>
    %cst_68 = arith.constant 0.353553385 : f32
    %171 = vector.broadcast %cst_68 : f32 to vector<8x8xf32>
    %172 = arith.mulf %170, %171 : vector<8x8xf32>
    %173 = vector.broadcast %106 : vector<1x8xf32> to vector<8x8xf32>
    %174 = arith.addf %172, %173 : vector<8x8xf32>
    %cst_69 = arith.constant dense<0xFF800000> : vector<8xf32>
    %175 = vector.multi_reduction <maximumf>, %174, %cst_69 [1] : vector<8x8xf32> to vector<8xf32>
    %176 = vector.shape_cast %175 : vector<8xf32> to vector<8x1xf32>
    %177 = vector.broadcast %176 : vector<8x1xf32> to vector<8x8xf32>
    %178 = arith.subf %174, %177 : vector<8x8xf32>
    %179 = math.exp %178 : vector<8x8xf32>
    %cst_70 = arith.constant dense<0.000000e+00> : vector<8xf32>
    %180 = vector.multi_reduction <add>, %179, %cst_70 [1] : vector<8x8xf32> to vector<8xf32>
    %181 = vector.shape_cast %180 : vector<8xf32> to vector<8x1xf32>
    %182 = tpu.reciprocal %181 : vector<8x1xf32> -> vector<8x1xf32>
    %183 = vector.broadcast %182 : vector<8x1xf32> to vector<8x8xf32>
    %184 = arith.mulf %179, %183 : vector<8x8xf32>
    %cst_71 = arith.constant dense<0.000000e+00> : vector<8x8xf32>
    %185 = tpu.matmul %184, %169, %cst_71 {dimension_numbers = #tpu.dot_dimension_numbers<[1], [0], [0], [1], [0, 0, 1, 1], [], []>} : vector<8x8xf32>, vector<8x8xf32>, vector<8x8xf32> -> vector<8x8xf32>
    %c8_72 = arith.constant 8 : index
    %c24_73 = arith.constant 24 : index
    %186 = vector.load %arg13[%c8_72, %c24_73] : memref<16x32xf32, #tpu.memory_space<vmem>>, vector<8x8xf32>
    tpu.vector_store %arg13[%c8_72, %c24_73], %185 {strides = array<i32>} : memref<16x32xf32, #tpu.memory_space<vmem>>, vector<8x8xf32>,
    %c0_74 = arith.constant 0 : index
    %c0_75 = arith.constant 0 : index
    %187 = vector.load %arg13[%c0_74, %c0_75] : memref<16x32xf32, #tpu.memory_space<vmem>>, vector<16x32xf32>
    %c0_76 = arith.constant 0 : index
    %c0_77 = arith.constant 0 : index
    %188 = vector.load %arg7[%c0_76, %c0_77] : memref<32x32xf32, #tpu.memory_space<vmem>>, vector<32x32xf32>
    %cst_78 = arith.constant dense<0.000000e+00> : vector<16x32xf32>
    %189 = tpu.matmul %187, %188, %cst_78 {dimension_numbers = #tpu.dot_dimension_numbers<[1], [0], [0], [1], [0, 0, 1, 1], [], []>} : vector<16x32xf32>, vector<32x32xf32>, vector<16x32xf32> -> vector<16x32xf32>
    %c0_79 = arith.constant 0 : index
    %c0_80 = arith.constant 0 : index
    %190 = vector.load %arg11[%c0_79, %c0_80] : memref<1x32xf32, #tpu.memory_space<vmem>>, vector<1x32xf32>
    %191 = vector.broadcast %190 : vector<1x32xf32> to vector<16x32xf32>
    %192 = arith.addf %189, %191 : vector<16x32xf32>
    %c0_81 = arith.constant 0 : index
    %c0_82 = arith.constant 0 : index
    %193 = vector.load %arg12[%c0_81, %c0_82] : memref<16x32xf32, #tpu.memory_space<vmem>>, vector<16x32xf32>
    tpu.vector_store %arg12[%c0_81, %c0_82], %192 {strides = array<i32>} : memref<16x32xf32, #tpu.memory_space<vmem>>, vector<16x32xf32>,
    return
  }
}

</mosaic_0001>

<llo_original>
// kernel: tpu_custom_call.1
$region0: #{tpu_custom_call.1}
  #allocation0 [shape = 'u32[]', space=smem, size = 0x4, offset = 0x4, fixed_abs, tag = 'smem constant byte address 0x4 - core index']
  #allocation1 [shape = 'u32[144,128]{1,0:T(1,128)}', space=vmem, size = 0x12000, scoped, tag = 'internal scratch']
  #allocation2 [shape = 'f32[16,32]{1,0:T(8,128)}', space=vmem, size = 0x2000, scoped, tag = 'scratch operand']
  %s0 = inlined_call_operand.hbm [shape: f32[16,32], index: 0, kind: input, shape index: {}]
  %s1 = inlined_call_operand.hbm [shape: f32[16,32], index: 1, kind: input, shape index: {}]
  %s2 = inlined_call_operand.hbm [shape: f32[16,32], index: 2, kind: input, shape index: {}]
  %s3 = inlined_call_operand.vmem [shape: f32[2,8], index: 3, kind: input, shape index: {}]
  %s4 = inlined_call_operand.hbm [shape: f32[32,32], index: 4, kind: input, shape index: {}]
  %s5 = inlined_call_operand.hbm [shape: f32[32,32], index: 5, kind: input, shape index: {}]
  %s6 = inlined_call_operand.hbm [shape: f32[32,32], index: 6, kind: input, shape index: {}]
  %s7 = inlined_call_operand.hbm [shape: f32[32,32], index: 7, kind: input, shape index: {}]
  %s8 = inlined_call_operand.vmem [shape: f32[1,32], index: 8, kind: input, shape index: {}]
  %s9 = inlined_call_operand.vmem [shape: f32[1,32], index: 9, kind: input, shape index: {}]
  %s10 = inlined_call_operand.vmem [shape: f32[1,32], index: 10, kind: input, shape index: {}]
  %s11 = inlined_call_operand.vmem [shape: f32[1,32], index: 11, kind: input, shape index: {}]
  %s12 = inlined_call_operand.hbm [shape: f32[16,32], index: 12, kind: output, shape index: {}]
  %s13 = sld [smem:[#allocation0]]
  $region86: #{tpu_custom_call.1} parent=0
    _
  %s15 = ssub.s32 1, %s13
  %s16 = scalar_select 0, %s15, %s13
  $region1: #{tpu_custom_call.1} parent=0
    #allocation3 [shape = 'u8[8192]{0}', space=vmem, size = 0x2000, scoped, tag = 'input window, operand 0, single buffered']
    #allocation4 [shape = 's32[1]{0}', space=sflag, size = 0x4, scoped, tag = 'scoped memory for tpu_custom_call.1']
    #allocation5 [shape = 's32[1]{0}', space=sflag, size = 0x4, scoped, tag = 'scoped memory for tpu_custom_call.1']
    #allocation6 [shape = 'u8[8192]{0}', space=vmem, size = 0x2000, scoped, tag = 'input window, operand 1, single buffered']
    #allocation7 [shape = 's32[1]{0}', space=sflag, size = 0x4, scoped, tag = 'scoped memory for tpu_custom_call.1']
    #allocation8 [shape = 'u8[8192]{0}', space=vmem, size = 0x2000, scoped, tag = 'input window, operand 2, single buffered']
    #allocation9 [shape = 'u8[16384]{0}', space=vmem, size = 0x4000, scoped, tag = 'input window, operand 4, single buffered']
    #allocation10 [shape = 's32[1]{0}', space=sflag, size = 0x4, scoped, tag = 'scoped memory for tpu_custom_call.1']
    #allocation11 [shape = 'u8[16384]{0}', space=vmem, size = 0x4000, scoped, tag = 'input window, operand 5, single buffered']
    #allocation12 [shape = 'u8[16384]{0}', space=vmem, size = 0x4000, scoped, tag = 'input window, operand 6, single buffered']
    #allocation13 [shape = 's32[1]{0}', space=sflag, size = 0x4, scoped, tag = 'scoped memory for tpu_custom_call.1']
    #allocation14 [shape = 'u8[16384]{0}', space=vmem, size = 0x4000, scoped, tag = 'input window, operand 7, single buffered']
    #allocation15 [shape = 'u8[8192]{0}', space=vmem, size = 0x2000, scoped, tag = 'output window, operand 0, single buffered']
    %17 = vsyncpa [#allocation4], 0
    %18 = vsyncpa [#allocation7], 0
    %19 = vsyncpa [#allocation10], 0
    %20 = vsyncpa [#allocation13], 0
    %21 = vsyncpa [#allocation5], 0
    // Predicated region
    $region2: #{tpu_custom_call.1} parent=1 // pred_check
      _
    $region3: #{tpu_custom_call.1} parent=1 // pred_check_branch
      %23 = sbr.rel (0) target = $region5
    $region4: #{tpu_custom_call.1} parent=1 // pred_region
      %s25 = ssub.s32 256, 256
      %26 = vsyncadd [#allocation4], %s25
      %s27 = sshll.u32 [#allocation3], 4
      %s28 = int_to_ptr.vmem [resolvable:$true] %s27
      %33 = dma.hbm_to_vmem [thread:$0]  %s0, 256, %s28, [#allocation4], 128, 128, 8
    $region5: #{tpu_custom_call.1} parent=1 // pred_fallthru
      _
    // Predicated region
    $region6: #{tpu_custom_call.1} parent=1 // pred_check
      _
    $region7: #{tpu_custom_call.1} parent=1 // pred_check_branch
      %35 = sbr.rel (0) target = $region9
    $region8: #{tpu_custom_call.1} parent=1 // pred_region
      %s37 = ssub.s32 256, 256
      %38 = vsyncadd [#allocation7], %s37
      %s39 = sshll.u32 [#allocation6], 4
      %s40 = int_to_ptr.vmem [resolvable:$true] %s39
      %45 = dma.hbm_to_vmem [thread:$0]  %s1, 256, %s40, [#allocation7], 128, 128, 8
    $region9: #{tpu_custom_call.1} parent=1 // pred_fallthru
      _
    // Predicated region
    $region10: #{tpu_custom_call.1} parent=1 // pred_check
      _
    $region11: #{tpu_custom_call.1} parent=1 // pred_check_branch
      %47 = sbr.rel (0) target = $region13
    $region12: #{tpu_custom_call.1} parent=1 // pred_region
      %s49 = ssub.s32 256, 256
      %50 = vsyncadd [#allocation7], %s49
      %s51 = sshll.u32 [#allocation8], 4
      %s52 = int_to_ptr.vmem [resolvable:$true] %s51
      %57 = dma.hbm_to_vmem [thread:$0]  %s2, 256, %s52, [#allocation7], 128, 128, 8
    $region13: #{tpu_custom_call.1} parent=1 // pred_fallthru
      _
    // Predicated region
    $region14: #{tpu_custom_call.1} parent=1 // pred_check
      _
    $region15: #{tpu_custom_call.1} parent=1 // pred_check_branch
      %59 = sbr.rel (0) target = $region17
    $region16: #{tpu_custom_call.1} parent=1 // pred_region
      _
    $region17: #{tpu_custom_call.1} parent=1 // pred_fallthru
      _
    // Predicated region
    $region18: #{tpu_custom_call.1} parent=1 // pred_check
      _
    $region19: #{tpu_custom_call.1} parent=1 // pred_check_branch
      %61 = sbr.rel (0) target = $region21
    $region20: #{tpu_custom_call.1} parent=1 // pred_region
      %s63 = ssub.s32 512, 512
      %64 = vsyncadd [#allocation10], %s63
      %s65 = sshll.u32 [#allocation9], 4
      %s66 = int_to_ptr.vmem [resolvable:$true] %s65
      %71 = dma.hbm_to_vmem [thread:$0]  %s4, 512, %s66, [#allocation10], 128, 128, 8
    $region21: #{tpu_custom_call.1} parent=1 // pred_fallthru
      _
    // Predicated region
    $region22: #{tpu_custom_call.1} parent=1 // pred_check
      _
    $region23: #{tpu_custom_call.1} parent=1 // pred_check_branch
      %73 = sbr.rel (0) target = $region25
    $region24: #{tpu_custom_call.1} parent=1 // pred_region
      %s75 = ssub.s32 512, 512
      %76 = vsyncadd [#allocation10], %s75
      %s77 = sshll.u32 [#allocation11], 4
      %s78 = int_to_ptr.vmem [resolvable:$true] %s77
      %83 = dma.hbm_to_vmem [thread:$0]  %s5, 512, %s78, [#allocation10], 128, 128, 8
    $region25: #{tpu_custom_call.1} parent=1 // pred_fallthru
      _
    // Predicated region
    $region26: #{tpu_custom_call.1} parent=1 // pred_check
      _
    $region27: #{tpu_custom_call.1} parent=1 // pred_check_branch
      %85 = sbr.rel (0) target = $region29
    $region28: #{tpu_custom_call.1} parent=1 // pred_region
      %s87 = ssub.s32 512, 512
      %88 = vsyncadd [#allocation13], %s87
      %s89 = sshll.u32 [#allocation12], 4
      %s90 = int_to_ptr.vmem [resolvable:$true] %s89
      %95 = dma.hbm_to_vmem [thread:$0]  %s6, 512, %s90, [#allocation13], 128, 128, 8
    $region29: #{tpu_custom_call.1} parent=1 // pred_fallthru
      _
    // Predicated region
    $region30: #{tpu_custom_call.1} parent=1 // pred_check
      _
    $region31: #{tpu_custom_call.1} parent=1 // pred_check_branch
      %97 = sbr.rel (0) target = $region33
    $region32: #{tpu_custom_call.1} parent=1 // pred_region
      %s99 = ssub.s32 512, 512
      %100 = vsyncadd [#allocation13], %s99
      %s101 = sshll.u32 [#allocation14], 4
      %s102 = int_to_ptr.vmem [resolvable:$true] %s101
      %107 = dma.hbm_to_vmem [thread:$0]  %s7, 512, %s102, [#allocation13], 128, 128, 8
    $region33: #{tpu_custom_call.1} parent=1 // pred_fallthru
      _
    // Predicated region
    $region34: #{tpu_custom_call.1} parent=1 // pred_check
      _
    $region35: #{tpu_custom_call.1} parent=1 // pred_check_branch
      %109 = sbr.rel (0) target = $region37
    $region36: #{tpu_custom_call.1} parent=1 // pred_region
      _
    $region37: #{tpu_custom_call.1} parent=1 // pred_fallthru
      _
    // Predicated region
    $region38: #{tpu_custom_call.1} parent=1 // pred_check
      _
    $region39: #{tpu_custom_call.1} parent=1 // pred_check_branch
      %111 = sbr.rel (0) target = $region41
    $region40: #{tpu_custom_call.1} parent=1 // pred_region
      _
    $region41: #{tpu_custom_call.1} parent=1 // pred_fallthru
      _
    // Predicated region
    $region42: #{tpu_custom_call.1} parent=1 // pred_check
      _
    $region43: #{tpu_custom_call.1} parent=1 // pred_check_branch
      %113 = sbr.rel (0) target = $region45
    $region44: #{tpu_custom_call.1} parent=1 // pred_region
      _
    $region45: #{tpu_custom_call.1} parent=1 // pred_fallthru
      _
    // Predicated region
    $region46: #{tpu_custom_call.1} parent=1 // pred_check
      _
    $region47: #{tpu_custom_call.1} parent=1 // pred_check_branch
      %115 = sbr.rel (0) target = $region49
    $region48: #{tpu_custom_call.1} parent=1 // pred_region
      _
    $region49: #{tpu_custom_call.1} parent=1 // pred_fallthru
      _
    // Predicated region
    $region50: #{tpu_custom_call.1} parent=1 // pred_check
      _
    $region51: #{tpu_custom_call.1} parent=1 // pred_check_branch
      %117 = sbr.rel (0) target = $region53
    $region52: #{tpu_custom_call.1} parent=1 // pred_region
      %118 = dma.done [#allocation4], 256
    $region53: #{tpu_custom_call.1} parent=1 // pred_fallthru
      _
    // Predicated region
    $region54: #{tpu_custom_call.1} parent=1 // pred_check
      _
    $region55: #{tpu_custom_call.1} parent=1 // pred_check_branch
      %120 = sbr.rel (0) target = $region57
    $region56: #{tpu_custom_call.1} parent=1 // pred_region
      %121 = dma.done [#allocation7], 256
    $region57: #{tpu_custom_call.1} parent=1 // pred_fallthru
      _
    // Predicated region
    $region58: #{tpu_custom_call.1} parent=1 // pred_check
      _
    $region59: #{tpu_custom_call.1} parent=1 // pred_check_branch
      %123 = sbr.rel (0) target = $region61
    $region60: #{tpu_custom_call.1} parent=1 // pred_region
      %124 = dma.done [#allocation7], 256
    $region61: #{tpu_custom_call.1} parent=1 // pred_fallthru
      _
    // Predicated region
    $region62: #{tpu_custom_call.1} parent=1 // pred_check
      _
    $region63: #{tpu_custom_call.1} parent=1 // pred_check_branch
      %126 = sbr.rel (0) target = $region65
    $region64: #{tpu_custom_call.1} parent=1 // pred_region
      %127 = dma.done [#allocation10], 512
    $region65: #{tpu_custom_call.1} parent=1 // pred_fallthru
      _
    // Predicated region
    $region66: #{tpu_custom_call.1} parent=1 // pred_check
      _
    $region67: #{tpu_custom_call.1} parent=1 // pred_check_branch
      %129 = sbr.rel (0) target = $region69
    $region68: #{tpu_custom_call.1} parent=1 // pred_region
      %130 = dma.done [#allocation10], 512
    $region69: #{tpu_custom_call.1} parent=1 // pred_fallthru
      _
    // Predicated region
    $region70: #{tpu_custom_call.1} parent=1 // pred_check
      _
    $region71: #{tpu_custom_call.1} parent=1 // pred_check_branch
      %132 = sbr.rel (0) target = $region73
    $region72: #{tpu_custom_call.1} parent=1 // pred_region
      %133 = dma.done [#allocation13], 512
    $region73: #{tpu_custom_call.1} parent=1 // pred_fallthru
      _
    // Predicated region
    $region74: #{tpu_custom_call.1} parent=1 // pred_check
      _
    $region75: #{tpu_custom_call.1} parent=1 // pred_check_branch
      %135 = sbr.rel (0) target = $region77
    $region76: #{tpu_custom_call.1} parent=1 // pred_region
      %136 = dma.done [#allocation13], 512
    $region77: #{tpu_custom_call.1} parent=1 // pred_fallthru
      _
    %v137 = vld [vmem:[#allocation3] sm:$0xff]
    %v138 = vld [vmem:[#allocation3 + $0x8] sm:$0xff]
    %v139 = vld [vmem:[#allocation9] sm:$0xff]
    %v140 = vld [vmem:[#allocation9 + $0x8] sm:$0xff]
    %v141 = vld [vmem:[#allocation9 + $0x10] sm:$0xff]
    %v142 = vld [vmem:[#allocation9 + $0x18] sm:$0xff]
    %v143 = vld [vmem:[%s8] sm:$0x1]
    %v145 = vlaneseq
    %v146 = vshrl.u32 %v145, 7
    %v147 = vsub.s32 0, %v146
    %v148 = vrot.slane %v143, %v147
    %vm150 = vcmask 261120
    %v152 = vsel %vm150, %v137, 0
    %v155 = vsel %vm150, %v138, 0
    %157 = vmatprep.subr.mxu0 0.0
    %158 = vmatpush1.msra.mxu0 %v139
    %159 = vmatprep.subr.mxu0 0.0
    %160 = vmatpush1.msra.mxu0 %v140
    %161 = vmatprep.subr.mxu0 0.0
    %162 = vmatpush1.msra.mxu0 %v141
    %163 = vmatprep.subr.mxu0 0.0
    %164 = vmatpush1.msra.mxu0 %v142
    %165 = vmatprep.subr.mxu0 0.0
    %166 = vmatpush1.msra.mxu0 0.0
    %167 = vmatprep.subr.mxu0 0.0
    %168 = vmatpush1.msra.mxu0 0.0
    %169 = vmatprep.subr.mxu0 0.0
    %170 = vmatpush1.msra.mxu0 0.0
    %171 = vmatprep.subr.mxu0 0.0
    %172 = vmatpush1.msra.mxu0 0.0
    %173 = vmatprep.subr.mxu0 0.0
    %174 = vmatpush1.msra.mxu0 0.0
    %175 = vmatprep.subr.mxu0 0.0
    %176 = vmatpush1.msra.mxu0 0.0
    %177 = vmatprep.subr.mxu0 0.0
    %178 = vmatpush1.msra.mxu0 0.0
    %179 = vmatprep.subr.mxu0 0.0
    %180 = vmatpush1.msra.mxu0 0.0
    %181 = vmatprep.subr.mxu0 0.0
    %182 = vmatpush1.msra.mxu0 0.0
    %183 = vmatprep.subr.mxu0 0.0
    %184 = vmatpush1.msra.mxu0 0.0
    %185 = vmatprep.subr.mxu0 0.0
    %186 = vmatpush1.msra.mxu0 0.0
    %187 = vmatprep.subr.mxu0 0.0
    %188 = vmatpush1.msra.mxu0 0.0
    %189 = vmatprep.subr.mxu0 0.0
    %190 = vmatpush1.msra.mxu0 0.0
    %191 = vmatprep.subr.mxu0 0.0
    %192 = vmatpush1.msra.mxu0 0.0
    %193 = vmatprep.subr.mxu0 0.0
    %194 = vmatpush1.msra.mxu0 0.0
    %195 = vmatprep.subr.mxu0 0.0
    %196 = vmatpush1.msra.mxu0 0.0
    %197 = vmatprep.subr.mxu0 0.0
    %198 = vmatpush1.msra.mxu0 0.0
    %199 = vmatprep.subr.mxu0 0.0
    %200 = vmatpush1.msra.mxu0 0.0
    %201 = vmatprep.subr.mxu0 0.0
    %202 = vmatpush1.msra.mxu0 0.0
    %203 = vmatprep.subr.mxu0 0.0
    %204 = vmatpush1.msra.mxu0 0.0
    %205 = vmatprep.subr.mxu0 0.0
    %206 = vmatpush1.msra.mxu0 0.0
    %207 = vmatprep.subr.mxu0 0.0
    %208 = vmatpush1.msra.mxu0 0.0
    %209 = vmatprep.subr.mxu0 0.0
    %210 = vmatpush1.msra.mxu0 0.0
    %211 = vmatprep.subr.mxu0 0.0
    %212 = vmatpush1.msra.mxu0 0.0
    %213 = vmatprep.subr.mxu0 0.0
    %214 = vmatpush1.msra.mxu0 0.0
    %215 = vmatprep.subr.mxu0 0.0
    %216 = vmatpush1.msra.mxu0 0.0
    %217 = vmatprep.subr.mxu0 0.0
    %218 = vmatpush1.msra.mxu0 0.0
    %219 = vmatprep.subr.mxu0 0.0
    %220 = vmatpush1.msra.mxu0 0.0
    %221 = vmatprep.mubr.f32.mxu0 0.0
    %222 = vmatmul.mubr.f32.gmra.mrb[0].mxu0 %v152
    %v223 = vpop.f32.mrb[0].mxu0
    %v224 = vadd.f32 %v148, %v223
    %v225 = vpop.f32.mrb[0].mxu0
    %226 = vmatprep.mubr.f32.mxu0 0.0
    %227 = vmatmul.mubr.f32.gmra.mrb[0].mxu0 %v155
    %v228 = vpop.f32.mrb[0].mxu0
    %v229 = vadd.f32 %v148, %v228
    %v230 = vpop.f32.mrb[0].mxu0
    %231 = vdwg.mxu0
    %v232 = vld [vmem:[#allocation6] sm:$0xff]
    %v233 = vld [vmem:[#allocation6 + $0x8] sm:$0xff]
    %v234 = vld [vmem:[#allocation11] sm:$0xff]
    %v235 = vld [vmem:[#allocation11 + $0x8] sm:$0xff]
    %v236 = vld [vmem:[#allocation11 + $0x10] sm:$0xff]
    %v237 = vld [vmem:[#allocation11 + $0x18] sm:$0xff]
    %v238 = vld [vmem:[%s9] sm:$0x1]
    %v240 = vlaneseq
    %v241 = vshrl.u32 %v240, 7
    %v242 = vsub.s32 0, %v241
    %v243 = vrot.slane %v238, %v242
    %v246 = vsel %vm150, %v232, 0
    %v249 = vsel %vm150, %v233, 0
    %251 = vmatprep.subr.mxu0 0.0
    %252 = vmatpush1.msra.mxu0 %v234
    %253 = vmatprep.subr.mxu0 0.0
    %254 = vmatpush1.msra.mxu0 %v235
    %255 = vmatprep.subr.mxu0 0.0
    %256 = vmatpush1.msra.mxu0 %v236
    %257 = vmatprep.subr.mxu0 0.0
    %258 = vmatpush1.msra.mxu0 %v237
    %259 = vmatprep.subr.mxu0 0.0
    %260 = vmatpush1.msra.mxu0 0.0
    %261 = vmatprep.subr.mxu0 0.0
    %262 = vmatpush1.msra.mxu0 0.0
    %263 = vmatprep.subr.mxu0 0.0
    %264 = vmatpush1.msra.mxu0 0.0
    %265 = vmatprep.subr.mxu0 0.0
    %266 = vmatpush1.msra.mxu0 0.0
    %267 = vmatprep.subr.mxu0 0.0
    %268 = vmatpush1.msra.mxu0 0.0
    %269 = vmatprep.subr.mxu0 0.0
    %270 = vmatpush1.msra.mxu0 0.0
    %271 = vmatprep.subr.mxu0 0.0
    %272 = vmatpush1.msra.mxu0 0.0
    %273 = vmatprep.subr.mxu0 0.0
    %274 = vmatpush1.msra.mxu0 0.0
    %275 = vmatprep.subr.mxu0 0.0
    %276 = vmatpush1.msra.mxu0 0.0
    %277 = vmatprep.subr.mxu0 0.0
    %278 = vmatpush1.msra.mxu0 0.0
    %279 = vmatprep.subr.mxu0 0.0
    %280 = vmatpush1.msra.mxu0 0.0
    %281 = vmatprep.subr.mxu0 0.0
    %282 = vmatpush1.msra.mxu0 0.0
    %283 = vmatprep.subr.mxu0 0.0
    %284 = vmatpush1.msra.mxu0 0.0
    %285 = vmatprep.subr.mxu0 0.0
    %286 = vmatpush1.msra.mxu0 0.0
    %287 = vmatprep.subr.mxu0 0.0
    %288 = vmatpush1.msra.mxu0 0.0
    %289 = vmatprep.subr.mxu0 0.0
    %290 = vmatpush1.msra.mxu0 0.0
    %291 = vmatprep.subr.mxu0 0.0
    %292 = vmatpush1.msra.mxu0 0.0
    %293 = vmatprep.subr.mxu0 0.0
    %294 = vmatpush1.msra.mxu0 0.0
    %295 = vmatprep.subr.mxu0 0.0
    %296 = vmatpush1.msra.mxu0 0.0
    %297 = vmatprep.subr.mxu0 0.0
    %298 = vmatpush1.msra.mxu0 0.0
    %299 = vmatprep.subr.mxu0 0.0
    %300 = vmatpush1.msra.mxu0 0.0
    %301 = vmatprep.subr.mxu0 0.0
    %302 = vmatpush1.msra.mxu0 0.0
    %303 = vmatprep.subr.mxu0 0.0
    %304 = vmatpush1.msra.mxu0 0.0
    %305 = vmatprep.subr.mxu0 0.0
    %306 = vmatpush1.msra.mxu0 0.0
    %307 = vmatprep.subr.mxu0 0.0
    %308 = vmatpush1.msra.mxu0 0.0
    %309 = vmatprep.subr.mxu0 0.0
    %310 = vmatpush1.msra.mxu0 0.0
    %311 = vmatprep.subr.mxu0 0.0
    %312 = vmatpush1.msra.mxu0 0.0
    %313 = vmatprep.subr.mxu0 0.0
    %314 = vmatpush1.msra.mxu0 0.0
    %315 = vmatprep.mubr.f32.mxu0 0.0
    %316 = vmatmul.mubr.f32.gmra.mrb[0].mxu0 %v246
    %v317 = vpop.f32.mrb[0].mxu0
    %v318 = vadd.f32 %v243, %v317
    %v319 = vpop.f32.mrb[0].mxu0
    %320 = vmatprep.mubr.f32.mxu0 0.0
    %321 = vmatmul.mubr.f32.gmra.mrb[0].mxu0 %v249
    %v322 = vpop.f32.mrb[0].mxu0
    %v323 = vadd.f32 %v243, %v322
    %v324 = vpop.f32.mrb[0].mxu0
    %325 = vdwg.mxu0
    %v326 = vld [vmem:[#allocation8] sm:$0xff]
    %v327 = vld [vmem:[#allocation8 + $0x8] sm:$0xff]
    %v328 = vld [vmem:[#allocation12] sm:$0xff]
    %v329 = vld [vmem:[#allocation12 + $0x8] sm:$0xff]
    %v330 = vld [vmem:[#allocation12 + $0x10] sm:$0xff]
    %v331 = vld [vmem:[#allocation12 + $0x18] sm:$0xff]
    %v332 = vld [vmem:[%s10] sm:$0x1]
    %v334 = vlaneseq
    %v335 = vshrl.u32 %v334, 7
    %v336 = vsub.s32 0, %v335
    %v337 = vrot.slane %v332, %v336
    %v340 = vsel %vm150, %v326, 0
    %v343 = vsel %vm150, %v327, 0
    %345 = vmatprep.subr.mxu0 0.0
    %346 = vmatpush1.msra.mxu0 %v328
    %347 = vmatprep.subr.mxu0 0.0
    %348 = vmatpush1.msra.mxu0 %v329
    %349 = vmatprep.subr.mxu0 0.0
    %350 = vmatpush1.msra.mxu0 %v330
    %351 = vmatprep.subr.mxu0 0.0
    %352 = vmatpush1.msra.mxu0 %v331
    %353 = vmatprep.subr.mxu0 0.0
    %354 = vmatpush1.msra.mxu0 0.0
    %355 = vmatprep.subr.mxu0 0.0
    %356 = vmatpush1.msra.mxu0 0.0
    %357 = vmatprep.subr.mxu0 0.0
    %358 = vmatpush1.msra.mxu0 0.0
    %359 = vmatprep.subr.mxu0 0.0
    %360 = vmatpush1.msra.mxu0 0.0
    %361 = vmatprep.subr.mxu0 0.0
    %362 = vmatpush1.msra.mxu0 0.0
    %363 = vmatprep.subr.mxu0 0.0
    %364 = vmatpush1.msra.mxu0 0.0
    %365 = vmatprep.subr.mxu0 0.0
    %366 = vmatpush1.msra.mxu0 0.0
    %367 = vmatprep.subr.mxu0 0.0
    %368 = vmatpush1.msra.mxu0 0.0
    %369 = vmatprep.subr.mxu0 0.0
    %370 = vmatpush1.msra.mxu0 0.0
    %371 = vmatprep.subr.mxu0 0.0
    %372 = vmatpush1.msra.mxu0 0.0
    %373 = vmatprep.subr.mxu0 0.0
    %374 = vmatpush1.msra.mxu0 0.0
    %375 = vmatprep.subr.mxu0 0.0
    %376 = vmatpush1.msra.mxu0 0.0
    %377 = vmatprep.subr.mxu0 0.0
    %378 = vmatpush1.msra.mxu0 0.0
    %379 = vmatprep.subr.mxu0 0.0
    %380 = vmatpush1.msra.mxu0 0.0
    %381 = vmatprep.subr.mxu0 0.0
    %382 = vmatpush1.msra.mxu0 0.0
    %383 = vmatprep.subr.mxu0 0.0
    %384 = vmatpush1.msra.mxu0 0.0
    %385 = vmatprep.subr.mxu0 0.0
    %386 = vmatpush1.msra.mxu0 0.0
    %387 = vmatprep.subr.mxu0 0.0
    %388 = vmatpush1.msra.mxu0 0.0
    %389 = vmatprep.subr.mxu0 0.0
    %390 = vmatpush1.msra.mxu0 0.0
    %391 = vmatprep.subr.mxu0 0.0
    %392 = vmatpush1.msra.mxu0 0.0
    %393 = vmatprep.subr.mxu0 0.0
    %394 = vmatpush1.msra.mxu0 0.0
    %395 = vmatprep.subr.mxu0 0.0
    %396 = vmatpush1.msra.mxu0 0.0
    %397 = vmatprep.subr.mxu0 0.0
    %398 = vmatpush1.msra.mxu0 0.0
    %399 = vmatprep.subr.mxu0 0.0
    %400 = vmatpush1.msra.mxu0 0.0
    %401 = vmatprep.subr.mxu0 0.0
    %402 = vmatpush1.msra.mxu0 0.0
    %403 = vmatprep.subr.mxu0 0.0
    %404 = vmatpush1.msra.mxu0 0.0
    %405 = vmatprep.subr.mxu0 0.0
    %406 = vmatpush1.msra.mxu0 0.0
    %407 = vmatprep.subr.mxu0 0.0
    %408 = vmatpush1.msra.mxu0 0.0
    %409 = vmatprep.mubr.f32.mxu0 0.0
    %410 = vmatmul.mubr.f32.gmra.mrb[0].mxu0 %v340
    %v411 = vpop.f32.mrb[0].mxu0
    %v412 = vadd.f32 %v337, %v411
    %v413 = vpop.f32.mrb[0].mxu0
    %414 = vmatprep.mubr.f32.mxu0 0.0
    %415 = vmatmul.mubr.f32.gmra.mrb[0].mxu0 %v343
    %v416 = vpop.f32.mrb[0].mxu0
    %v417 = vadd.f32 %v337, %v416
    %v418 = vpop.f32.mrb[0].mxu0
    %419 = vdwg.mxu0
    %v420 = vld [vmem:[%s3] sm:$0x3]
    %vm421 = vcmask 64512
    %v423 = vsel %vm421, %v412, 0
    %v426 = vsel %vm421, %v318, 0
    %428 = vmatprep.subr.mxu0 0.0
    %429 = vmatpush1.xpose.msra.mxu0 %v426
    %430 = vmatprep.subr.mxu0 0.0
    %431 = vmatpush1.xpose.msra.mxu0 0.0
    %432 = vmatprep.subr.mxu0 0.0
    %433 = vmatpush1.xpose.msra.mxu0 0.0
    %434 = vmatprep.subr.mxu0 0.0
    %435 = vmatpush1.xpose.msra.mxu0 0.0
    %436 = vmatprep.subr.mxu0 0.0
    %437 = vmatpush1.xpose.msra.mxu0 0.0
    %438 = vmatprep.subr.mxu0 0.0
    %439 = vmatpush1.xpose.msra.mxu0 0.0
    %440 = vmatprep.subr.mxu0 0.0
    %441 = vmatpush1.xpose.msra.mxu0 0.0
    %442 = vmatprep.subr.mxu0 0.0
    %443 = vmatpush1.xpose.msra.mxu0 0.0
    %444 = vmatprep.subr.mxu0 0.0
    %445 = vmatpush1.xpose.msra.mxu0 0.0
    %446 = vmatprep.subr.mxu0 0.0
    %447 = vmatpush1.xpose.msra.mxu0 0.0
    %448 = vmatprep.subr.mxu0 0.0
    %449 = vmatpush1.xpose.msra.mxu0 0.0
    %450 = vmatprep.subr.mxu0 0.0
    %451 = vmatpush1.xpose.msra.mxu0 0.0
    %452 = vmatprep.subr.mxu0 0.0
    %453 = vmatpush1.xpose.msra.mxu0 0.0
    %454 = vmatprep.subr.mxu0 0.0
    %455 = vmatpush1.xpose.msra.mxu0 0.0
    %456 = vmatprep.subr.mxu0 0.0
    %457 = vmatpush1.xpose.msra.mxu0 0.0
    %458 = vmatprep.subr.mxu0 0.0
    %459 = vmatpush1.xpose.msra.mxu0 0.0
    %460 = vmatprep.subr.mxu0 0.0
    %461 = vmatpush1.xpose.msra.mxu0 0.0
    %462 = vmatprep.subr.mxu0 0.0
    %463 = vmatpush1.xpose.msra.mxu0 0.0
    %464 = vmatprep.subr.mxu0 0.0
    %465 = vmatpush1.xpose.msra.mxu0 0.0
    %466 = vmatprep.subr.mxu0 0.0
    %467 = vmatpush1.xpose.msra.mxu0 0.0
    %468 = vmatprep.subr.mxu0 0.0
    %469 = vmatpush1.xpose.msra.mxu0 0.0
    %470 = vmatprep.subr.mxu0 0.0
    %471 = vmatpush1.xpose.msra.mxu0 0.0
    %472 = vmatprep.subr.mxu0 0.0
    %473 = vmatpush1.xpose.msra.mxu0 0.0
    %474 = vmatprep.subr.mxu0 0.0
    %475 = vmatpush1.xpose.msra.mxu0 0.0
    %476 = vmatprep.subr.mxu0 0.0
    %477 = vmatpush1.xpose.msra.mxu0 0.0
    %478 = vmatprep.subr.mxu0 0.0
    %479 = vmatpush1.xpose.msra.mxu0 0.0
    %480 = vmatprep.subr.mxu0 0.0
    %481 = vmatpush1.xpose.msra.mxu0 0.0
    %482 = vmatprep.subr.mxu0 0.0
    %483 = vmatpush1.xpose.msra.mxu0 0.0
    %484 = vmatprep.subr.mxu0 0.0
    %485 = vmatpush1.xpose.msra.mxu0 0.0
    %486 = vmatprep.subr.mxu0 0.0
    %487 = vmatpush1.xpose.msra.mxu0 0.0
    %488 = vmatprep.subr.mxu0 0.0
    %489 = vmatpush1.xpose.msra.mxu0 0.0
    %490 = vmatprep.subr.mxu0 0.0
    %491 = vmatpush1.xpose.msra.mxu0 0.0
    %492 = vmatprep.mubr.f32.mxu0 0.0
    %493 = vmatmul.mubr.f32.gmra.mrb[0].mxu0 %v423
    %v494 = vpop.f32.mrb[0].mxu0
    %v495 = vadd.f32 0.0, %v494
    %v496 = vpop.f32.mrb[0].mxu0
    %497 = vdwg.mxu0
    %v498 = vmul.f32 %v495, 0.35355338
    %v499 = vlaneseq
    %v500 = vshrl.u32 %v499, 7
    %v501 = vsub.s32 0, %v500
    %v502 = vrot.slane %v420, %v501
    %v503 = vadd.f32 %v498, %v502
    %v504 = vsel %vm421, %v503, -inf
    %505 = vmax.xlane.f32.xlu0 %v504
    %v506 = vpop.xlane.xlu0 %505
    %v507 = vsub.f32 %v503, %v506
    %v508 = vmul.f32 %v507, 1.442695
    %v509 = vpow.pop %v508
    %v510 = vsel %vm421, %v509, 0.0
    %511 = vadd.xlane.f32.xlu0 %v510
    %v512 = vpop.xlane.xlu0 %511
    %v513 = vrcp.pop %v512
    %v514 = vmul.f32 %v509, %v513
    %v516 = vsel %vm421, %v514, 0
    %518 = vmatprep.subr.mxu0 0.0
    %519 = vmatpush1.msra.mxu0 %v224
    %520 = vmatprep.subr.mxu0 0.0
    %521 = vmatpush1.msra.mxu0 0.0
    %522 = vmatprep.subr.mxu0 0.0
    %523 = vmatpush1.msra.mxu0 0.0
    %524 = vmatprep.subr.mxu0 0.0
    %525 = vmatpush1.msra.mxu0 0.0
    %526 = vmatprep.subr.mxu0 0.0
    %527 = vmatpush1.msra.mxu0 0.0
    %528 = vmatprep.subr.mxu0 0.0
    %529 = vmatpush1.msra.mxu0 0.0
    %530 = vmatprep.subr.mxu0 0.0
    %531 = vmatpush1.msra.mxu0 0.0
    %532 = vmatprep.subr.mxu0 0.0
    %533 = vmatpush1.msra.mxu0 0.0
    %534 = vmatprep.subr.mxu0 0.0
    %535 = vmatpush1.msra.mxu0 0.0
    %536 = vmatprep.subr.mxu0 0.0
    %537 = vmatpush1.msra.mxu0 0.0
    %538 = vmatprep.subr.mxu0 0.0
    %539 = vmatpush1.msra.mxu0 0.0
    %540 = vmatprep.subr.mxu0 0.0
    %541 = vmatpush1.msra.mxu0 0.0
    %542 = vmatprep.subr.mxu0 0.0
    %543 = vmatpush1.msra.mxu0 0.0
    %544 = vmatprep.subr.mxu0 0.0
    %545 = vmatpush1.msra.mxu0 0.0
    %546 = vmatprep.subr.mxu0 0.0
    %547 = vmatpush1.msra.mxu0 0.0
    %548 = vmatprep.subr.mxu0 0.0
    %549 = vmatpush1.msra.mxu0 0.0
    %550 = vmatprep.subr.mxu0 0.0
    %551 = vmatpush1.msra.mxu0 0.0
    %552 = vmatprep.subr.mxu0 0.0
    %553 = vmatpush1.msra.mxu0 0.0
    %554 = vmatprep.subr.mxu0 0.0
    %555 = vmatpush1.msra.mxu0 0.0
    %556 = vmatprep.subr.mxu0 0.0
    %557 = vmatpush1.msra.mxu0 0.0
    %558 = vmatprep.subr.mxu0 0.0
    %559 = vmatpush1.msra.mxu0 0.0
    %560 = vmatprep.subr.mxu0 0.0
    %561 = vmatpush1.msra.mxu0 0.0
    %562 = vmatprep.subr.mxu0 0.0
    %563 = vmatpush1.msra.mxu0 0.0
    %564 = vmatprep.subr.mxu0 0.0
    %565 = vmatpush1.msra.mxu0 0.0
    %566 = vmatprep.subr.mxu0 0.0
    %567 = vmatpush1.msra.mxu0 0.0
    %568 = vmatprep.subr.mxu0 0.0
    %569 = vmatpush1.msra.mxu0 0.0
    %570 = vmatprep.subr.mxu0 0.0
    %571 = vmatpush1.msra.mxu0 0.0
    %572 = vmatprep.subr.mxu0 0.0
    %573 = vmatpush1.msra.mxu0 0.0
    %574 = vmatprep.subr.mxu0 0.0
    %575 = vmatpush1.msra.mxu0 0.0
    %576 = vmatprep.subr.mxu0 0.0
    %577 = vmatpush1.msra.mxu0 0.0
    %578 = vmatprep.subr.mxu0 0.0
    %579 = vmatpush1.msra.mxu0 0.0
    %580 = vmatprep.subr.mxu0 0.0
    %581 = vmatpush1.msra.mxu0 0.0
    %582 = vmatprep.mubr.f32.mxu0 0.0
    %583 = vmatmul.mubr.f32.gmra.mrb[0].mxu0 %v516
    %v584 = vpop.f32.mrb[0].mxu0
    %v585 = vadd.f32 0.0, %v584
    %v586 = vpop.f32.mrb[0].mxu0
    %587 = vdwg.mxu0
    %588 = vst.msk [vmem:[#allocation2] sm:$0xff] %vm421, %v585
    %589 = vrot.lane.b32.xlu0 %v412, 120
    %v590 = vpop.permute.xlu0 %589
    %591 = vrot.lane.b32.xlu0 %v318, 120
    %v592 = vpop.permute.xlu0 %591
    %v593 = vsel %vm421, %v590, 0
    %v595 = vsel %vm421, %v592, 0
    %597 = vmatprep.subr.mxu0 0.0
    %598 = vmatpush1.xpose.msra.mxu0 %v595
    %599 = vmatprep.subr.mxu0 0.0
    %600 = vmatpush1.xpose.msra.mxu0 0.0
    %601 = vmatprep.subr.mxu0 0.0
    %602 = vmatpush1.xpose.msra.mxu0 0.0
    %603 = vmatprep.subr.mxu0 0.0
    %604 = vmatpush1.xpose.msra.mxu0 0.0
    %605 = vmatprep.subr.mxu0 0.0
    %606 = vmatpush1.xpose.msra.mxu0 0.0
    %607 = vmatprep.subr.mxu0 0.0
    %608 = vmatpush1.xpose.msra.mxu0 0.0
    %609 = vmatprep.subr.mxu0 0.0
    %610 = vmatpush1.xpose.msra.mxu0 0.0
    %611 = vmatprep.subr.mxu0 0.0
    %612 = vmatpush1.xpose.msra.mxu0 0.0
    %613 = vmatprep.subr.mxu0 0.0
    %614 = vmatpush1.xpose.msra.mxu0 0.0
    %615 = vmatprep.subr.mxu0 0.0
    %616 = vmatpush1.xpose.msra.mxu0 0.0
    %617 = vmatprep.subr.mxu0 0.0
    %618 = vmatpush1.xpose.msra.mxu0 0.0
    %619 = vmatprep.subr.mxu0 0.0
    %620 = vmatpush1.xpose.msra.mxu0 0.0
    %621 = vmatprep.subr.mxu0 0.0
    %622 = vmatpush1.xpose.msra.mxu0 0.0
    %623 = vmatprep.subr.mxu0 0.0
    %624 = vmatpush1.xpose.msra.mxu0 0.0
    %625 = vmatprep.subr.mxu0 0.0
    %626 = vmatpush1.xpose.msra.mxu0 0.0
    %627 = vmatprep.subr.mxu0 0.0
    %628 = vmatpush1.xpose.msra.mxu0 0.0
    %629 = vmatprep.subr.mxu0 0.0
    %630 = vmatpush1.xpose.msra.mxu0 0.0
    %631 = vmatprep.subr.mxu0 0.0
    %632 = vmatpush1.xpose.msra.mxu0 0.0
    %633 = vmatprep.subr.mxu0 0.0
    %634 = vmatpush1.xpose.msra.mxu0 0.0
    %635 = vmatprep.subr.mxu0 0.0
    %636 = vmatpush1.xpose.msra.mxu0 0.0
    %637 = vmatprep.subr.mxu0 0.0
    %638 = vmatpush1.xpose.msra.mxu0 0.0
    %639 = vmatprep.subr.mxu0 0.0
    %640 = vmatpush1.xpose.msra.mxu0 0.0
    %641 = vmatprep.subr.mxu0 0.0
    %642 = vmatpush1.xpose.msra.mxu0 0.0
    %643 = vmatprep.subr.mxu0 0.0
    %644 = vmatpush1.xpose.msra.mxu0 0.0
    %645 = vmatprep.subr.mxu0 0.0
    %646 = vmatpush1.xpose.msra.mxu0 0.0
    %647 = vmatprep.subr.mxu0 0.0
    %648 = vmatpush1.xpose.msra.mxu0 0.0
    %649 = vmatprep.subr.mxu0 0.0
    %650 = vmatpush1.xpose.msra.mxu0 0.0
    %651 = vmatprep.subr.mxu0 0.0
    %652 = vmatpush1.xpose.msra.mxu0 0.0
    %653 = vmatprep.subr.mxu0 0.0
    %654 = vmatpush1.xpose.msra.mxu0 0.0
    %655 = vmatprep.subr.mxu0 0.0
    %656 = vmatpush1.xpose.msra.mxu0 0.0
    %657 = vmatprep.subr.mxu0 0.0
    %658 = vmatpush1.xpose.msra.mxu0 0.0
    %659 = vmatprep.subr.mxu0 0.0
    %660 = vmatpush1.xpose.msra.mxu0 0.0
    %661 = vmatprep.mubr.f32.mxu0 0.0
    %662 = vmatmul.mubr.f32.gmra.mrb[0].mxu0 %v593
    %v663 = vpop.f32.mrb[0].mxu0
    %v664 = vadd.f32 0.0, %v663
    %v665 = vpop.f32.mrb[0].mxu0
    %666 = vdwg.mxu0
    %v667 = vmul.f32 %v664, 0.35355338
    %v668 = vadd.f32 %v667, %v502
    %v669 = vsel %vm421, %v668, -inf
    %670 = vmax.xlane.f32.xlu0 %v669
    %v671 = vpop.xlane.xlu0 %670
    %v672 = vsub.f32 %v668, %v671
    %v673 = vmul.f32 %v672, 1.442695
    %v674 = vpow.pop %v673
    %v675 = vsel %vm421, %v674, 0.0
    %676 = vadd.xlane.f32.xlu0 %v675
    %v677 = vpop.xlane.xlu0 %676
    %v678 = vrcp.pop %v677
    %v679 = vmul.f32 %v674, %v678
    %681 = vrot.lane.b32.xlu0 %v224, 120
    %v682 = vpop.permute.xlu0 %681
    %v685 = vsel %vm421, %v679, 0
    %687 = vmatprep.subr.mxu0 0.0
    %688 = vmatpush1.msra.mxu0 %v682
    %689 = vmatprep.subr.mxu0 0.0
    %690 = vmatpush1.msra.mxu0 0.0
    %691 = vmatprep.subr.mxu0 0.0
    %692 = vmatpush1.msra.mxu0 0.0
    %693 = vmatprep.subr.mxu0 0.0
    %694 = vmatpush1.msra.mxu0 0.0
    %695 = vmatprep.subr.mxu0 0.0
    %696 = vmatpush1.msra.mxu0 0.0
    %697 = vmatprep.subr.mxu0 0.0
    %698 = vmatpush1.msra.mxu0 0.0
    %699 = vmatprep.subr.mxu0 0.0
    %700 = vmatpush1.msra.mxu0 0.0
    %701 = vmatprep.subr.mxu0 0.0
    %702 = vmatpush1.msra.mxu0 0.0
    %703 = vmatprep.subr.mxu0 0.0
    %704 = vmatpush1.msra.mxu0 0.0
    %705 = vmatprep.subr.mxu0 0.0
    %706 = vmatpush1.msra.mxu0 0.0
    %707 = vmatprep.subr.mxu0 0.0
    %708 = vmatpush1.msra.mxu0 0.0
    %709 = vmatprep.subr.mxu0 0.0
    %710 = vmatpush1.msra.mxu0 0.0
    %711 = vmatprep.subr.mxu0 0.0
    %712 = vmatpush1.msra.mxu0 0.0
    %713 = vmatprep.subr.mxu0 0.0
    %714 = vmatpush1.msra.mxu0 0.0
    %715 = vmatprep.subr.mxu0 0.0
    %716 = vmatpush1.msra.mxu0 0.0
    %717 = vmatprep.subr.mxu0 0.0
    %718 = vmatpush1.msra.mxu0 0.0
    %719 = vmatprep.subr.mxu0 0.0
    %720 = vmatpush1.msra.mxu0 0.0
    %721 = vmatprep.subr.mxu0 0.0
    %722 = vmatpush1.msra.mxu0 0.0
    %723 = vmatprep.subr.mxu0 0.0
    %724 = vmatpush1.msra.mxu0 0.0
    %725 = vmatprep.subr.mxu0 0.0
    %726 = vmatpush1.msra.mxu0 0.0
    %727 = vmatprep.subr.mxu0 0.0
    %728 = vmatpush1.msra.mxu0 0.0
    %729 = vmatprep.subr.mxu0 0.0
    %730 = vmatpush1.msra.mxu0 0.0
    %731 = vmatprep.subr.mxu0 0.0
    %732 = vmatpush1.msra.mxu0 0.0
    %733 = vmatprep.subr.mxu0 0.0
    %734 = vmatpush1.msra.mxu0 0.0
    %735 = vmatprep.subr.mxu0 0.0
    %736 = vmatpush1.msra.mxu0 0.0
    %737 = vmatprep.subr.mxu0 0.0
    %738 = vmatpush1.msra.mxu0 0.0
    %739 = vmatprep.subr.mxu0 0.0
    %740 = vmatpush1.msra.mxu0 0.0
    %741 = vmatprep.subr.mxu0 0.0
    %742 = vmatpush1.msra.mxu0 0.0
    %743 = vmatprep.subr.mxu0 0.0
    %744 = vmatpush1.msra.mxu0 0.0
    %745 = vmatprep.subr.mxu0 0.0
    %746 = vmatpush1.msra.mxu0 0.0
    %747 = vmatprep.subr.mxu0 0.0
    %748 = vmatpush1.msra.mxu0 0.0
    %749 = vmatprep.subr.mxu0 0.0
    %750 = vmatpush1.msra.mxu0 0.0
    %751 = vmatprep.mubr.f32.mxu0 0.0
    %752 = vmatmul.mubr.f32.gmra.mrb[0].mxu0 %v685
    %v753 = vpop.f32.mrb[0].mxu0
    %v754 = vadd.f32 0.0, %v753
    %v755 = vpop.f32.mrb[0].mxu0
    %756 = vdwg.mxu0
    %758 = vrot.lane.b32.xlu0 %v754, 8
    %v759 = vpop.permute.xlu0 %758
    %vm761 = vcmask 130112
    %762 = vst.msk [vmem:[#allocation2] sm:$0xff] %vm761, %v759
    %763 = vrot.lane.b32.xlu0 %v412, 112
    %v764 = vpop.permute.xlu0 %763
    %765 = vrot.lane.b32.xlu0 %v318, 112
    %v766 = vpop.permute.xlu0 %765
    %v767 = vsel %vm421, %v764, 0
    %v769 = vsel %vm421, %v766, 0
    %771 = vmatprep.subr.mxu0 0.0
    %772 = vmatpush1.xpose.msra.mxu0 %v769
    %773 = vmatprep.subr.mxu0 0.0
    %774 = vmatpush1.xpose.msra.mxu0 0.0
    %775 = vmatprep.subr.mxu0 0.0
    %776 = vmatpush1.xpose.msra.mxu0 0.0
    %777 = vmatprep.subr.mxu0 0.0
    %778 = vmatpush1.xpose.msra.mxu0 0.0
    %779 = vmatprep.subr.mxu0 0.0
    %780 = vmatpush1.xpose.msra.mxu0 0.0
    %781 = vmatprep.subr.mxu0 0.0
    %782 = vmatpush1.xpose.msra.mxu0 0.0
    %783 = vmatprep.subr.mxu0 0.0
    %784 = vmatpush1.xpose.msra.mxu0 0.0
    %785 = vmatprep.subr.mxu0 0.0
    %786 = vmatpush1.xpose.msra.mxu0 0.0
    %787 = vmatprep.subr.mxu0 0.0
    %788 = vmatpush1.xpose.msra.mxu0 0.0
    %789 = vmatprep.subr.mxu0 0.0
    %790 = vmatpush1.xpose.msra.mxu0 0.0
    %791 = vmatprep.subr.mxu0 0.0
    %792 = vmatpush1.xpose.msra.mxu0 0.0
    %793 = vmatprep.subr.mxu0 0.0
    %794 = vmatpush1.xpose.msra.mxu0 0.0
    %795 = vmatprep.subr.mxu0 0.0
    %796 = vmatpush1.xpose.msra.mxu0 0.0
    %797 = vmatprep.subr.mxu0 0.0
    %798 = vmatpush1.xpose.msra.mxu0 0.0
    %799 = vmatprep.subr.mxu0 0.0
    %800 = vmatpush1.xpose.msra.mxu0 0.0
    %801 = vmatprep.subr.mxu0 0.0
    %802 = vmatpush1.xpose.msra.mxu0 0.0
    %803 = vmatprep.subr.mxu0 0.0
    %804 = vmatpush1.xpose.msra.mxu0 0.0
    %805 = vmatprep.subr.mxu0 0.0
    %806 = vmatpush1.xpose.msra.mxu0 0.0
    %807 = vmatprep.subr.mxu0 0.0
    %808 = vmatpush1.xpose.msra.mxu0 0.0
    %809 = vmatprep.subr.mxu0 0.0
    %810 = vmatpush1.xpose.msra.mxu0 0.0
    %811 = vmatprep.subr.mxu0 0.0
    %812 = vmatpush1.xpose.msra.mxu0 0.0
    %813 = vmatprep.subr.mxu0 0.0
    %814 = vmatpush1.xpose.msra.mxu0 0.0
    %815 = vmatprep.subr.mxu0 0.0
    %816 = vmatpush1.xpose.msra.mxu0 0.0
    %817 = vmatprep.subr.mxu0 0.0
    %818 = vmatpush1.xpose.msra.mxu0 0.0
    %819 = vmatprep.subr.mxu0 0.0
    %820 = vmatpush1.xpose.msra.mxu0 0.0
    %821 = vmatprep.subr.mxu0 0.0
    %822 = vmatpush1.xpose.msra.mxu0 0.0
    %823 = vmatprep.subr.mxu0 0.0
    %824 = vmatpush1.xpose.msra.mxu0 0.0
    %825 = vmatprep.subr.mxu0 0.0
    %826 = vmatpush1.xpose.msra.mxu0 0.0
    %827 = vmatprep.subr.mxu0 0.0
    %828 = vmatpush1.xpose.msra.mxu0 0.0
    %829 = vmatprep.subr.mxu0 0.0
    %830 = vmatpush1.xpose.msra.mxu0 0.0
    %831 = vmatprep.subr.mxu0 0.0
    %832 = vmatpush1.xpose.msra.mxu0 0.0
    %833 = vmatprep.subr.mxu0 0.0
    %834 = vmatpush1.xpose.msra.mxu0 0.0
    %835 = vmatprep.mubr.f32.mxu0 0.0
    %836 = vmatmul.mubr.f32.gmra.mrb[0].mxu0 %v767
    %v837 = vpop.f32.mrb[0].mxu0
    %v838 = vadd.f32 0.0, %v837
    %v839 = vpop.f32.mrb[0].mxu0
    %840 = vdwg.mxu0
    %v841 = vmul.f32 %v838, 0.35355338
    %v842 = vadd.f32 %v841, %v502
    %v843 = vsel %vm421, %v842, -inf
    %844 = vmax.xlane.f32.xlu0 %v843
    %v845 = vpop.xlane.xlu0 %844
    %v846 = vsub.f32 %v842, %v845
    %v847 = vmul.f32 %v846, 1.442695
    %v848 = vpow.pop %v847
    %v849 = vsel %vm421, %v848, 0.0
    %850 = vadd.xlane.f32.xlu0 %v849
    %v851 = vpop.xlane.xlu0 %850
    %v852 = vrcp.pop %v851
    %v853 = vmul.f32 %v848, %v852
    %854 = vrot.lane.b32.xlu0 %v224, 112
    %v855 = vpop.permute.xlu0 %854
    %v858 = vsel %vm421, %v853, 0
    %860 = vmatprep.subr.mxu0 0.0
    %861 = vmatpush1.msra.mxu0 %v855
    %862 = vmatprep.subr.mxu0 0.0
    %863 = vmatpush1.msra.mxu0 0.0
    %864 = vmatprep.subr.mxu0 0.0
    %865 = vmatpush1.msra.mxu0 0.0
    %866 = vmatprep.subr.mxu0 0.0
    %867 = vmatpush1.msra.mxu0 0.0
    %868 = vmatprep.subr.mxu0 0.0
    %869 = vmatpush1.msra.mxu0 0.0
    %870 = vmatprep.subr.mxu0 0.0
    %871 = vmatpush1.msra.mxu0 0.0
    %872 = vmatprep.subr.mxu0 0.0
    %873 = vmatpush1.msra.mxu0 0.0
    %874 = vmatprep.subr.mxu0 0.0
    %875 = vmatpush1.msra.mxu0 0.0
    %876 = vmatprep.subr.mxu0 0.0
    %877 = vmatpush1.msra.mxu0 0.0
    %878 = vmatprep.subr.mxu0 0.0
    %879 = vmatpush1.msra.mxu0 0.0
    %880 = vmatprep.subr.mxu0 0.0
    %881 = vmatpush1.msra.mxu0 0.0
    %882 = vmatprep.subr.mxu0 0.0
    %883 = vmatpush1.msra.mxu0 0.0
    %884 = vmatprep.subr.mxu0 0.0
    %885 = vmatpush1.msra.mxu0 0.0
    %886 = vmatprep.subr.mxu0 0.0
    %887 = vmatpush1.msra.mxu0 0.0
    %888 = vmatprep.subr.mxu0 0.0
    %889 = vmatpush1.msra.mxu0 0.0
    %890 = vmatprep.subr.mxu0 0.0
    %891 = vmatpush1.msra.mxu0 0.0
    %892 = vmatprep.subr.mxu0 0.0
    %893 = vmatpush1.msra.mxu0 0.0
    %894 = vmatprep.subr.mxu0 0.0
    %895 = vmatpush1.msra.mxu0 0.0
    %896 = vmatprep.subr.mxu0 0.0
    %897 = vmatpush1.msra.mxu0 0.0
    %898 = vmatprep.subr.mxu0 0.0
    %899 = vmatpush1.msra.mxu0 0.0
    %900 = vmatprep.subr.mxu0 0.0
    %901 = vmatpush1.msra.mxu0 0.0
    %902 = vmatprep.subr.mxu0 0.0
    %903 = vmatpush1.msra.mxu0 0.0
    %904 = vmatprep.subr.mxu0 0.0
    %905 = vmatpush1.msra.mxu0 0.0
    %906 = vmatprep.subr.mxu0 0.0
    %907 = vmatpush1.msra.mxu0 0.0
    %908 = vmatprep.subr.mxu0 0.0
    %909 = vmatpush1.msra.mxu0 0.0
    %910 = vmatprep.subr.mxu0 0.0
    %911 = vmatpush1.msra.mxu0 0.0
    %912 = vmatprep.subr.mxu0 0.0
    %913 = vmatpush1.msra.mxu0 0.0
    %914 = vmatprep.subr.mxu0 0.0
    %915 = vmatpush1.msra.mxu0 0.0
    %916 = vmatprep.subr.mxu0 0.0
    %917 = vmatpush1.msra.mxu0 0.0
    %918 = vmatprep.subr.mxu0 0.0
    %919 = vmatpush1.msra.mxu0 0.0
    %920 = vmatprep.subr.mxu0 0.0
    %921 = vmatpush1.msra.mxu0 0.0
    %922 = vmatprep.subr.mxu0 0.0
    %923 = vmatpush1.msra.mxu0 0.0
    %924 = vmatprep.mubr.f32.mxu0 0.0
    %925 = vmatmul.mubr.f32.gmra.mrb[0].mxu0 %v858
    %v926 = vpop.f32.mrb[0].mxu0
    %v927 = vadd.f32 0.0, %v926
    %v928 = vpop.f32.mrb[0].mxu0
    %929 = vdwg.mxu0
    %931 = vrot.lane.b32.xlu0 %v927, 16
    %v932 = vpop.permute.xlu0 %931
    %vm934 = vcmask 195712
    %935 = vst.msk [vmem:[#allocation2] sm:$0xff] %vm934, %v932
    %936 = vrot.lane.b32.xlu0 %v412, 104
    %v937 = vpop.permute.xlu0 %936
    %938 = vrot.lane.b32.xlu0 %v318, 104
    %v939 = vpop.permute.xlu0 %938
    %v940 = vsel %vm421, %v937, 0
    %v942 = vsel %vm421, %v939, 0
    %944 = vmatprep.subr.mxu0 0.0
    %945 = vmatpush1.xpose.msra.mxu0 %v942
    %946 = vmatprep.subr.mxu0 0.0
    %947 = vmatpush1.xpose.msra.mxu0 0.0
    %948 = vmatprep.subr.mxu0 0.0
    %949 = vmatpush1.xpose.msra.mxu0 0.0
    %950 = vmatprep.subr.mxu0 0.0
    %951 = vmatpush1.xpose.msra.mxu0 0.0
    %952 = vmatprep.subr.mxu0 0.0
    %953 = vmatpush1.xpose.msra.mxu0 0.0
    %954 = vmatprep.subr.mxu0 0.0
    %955 = vmatpush1.xpose.msra.mxu0 0.0
    %956 = vmatprep.subr.mxu0 0.0
    %957 = vmatpush1.xpose.msra.mxu0 0.0
    %958 = vmatprep.subr.mxu0 0.0
    %959 = vmatpush1.xpose.msra.mxu0 0.0
    %960 = vmatprep.subr.mxu0 0.0
    %961 = vmatpush1.xpose.msra.mxu0 0.0
    %962 = vmatprep.subr.mxu0 0.0
    %963 = vmatpush1.xpose.msra.mxu0 0.0
    %964 = vmatprep.subr.mxu0 0.0
    %965 = vmatpush1.xpose.msra.mxu0 0.0
    %966 = vmatprep.subr.mxu0 0.0
    %967 = vmatpush1.xpose.msra.mxu0 0.0
    %968 = vmatprep.subr.mxu0 0.0
    %969 = vmatpush1.xpose.msra.mxu0 0.0
    %970 = vmatprep.subr.mxu0 0.0
    %971 = vmatpush1.xpose.msra.mxu0 0.0
    %972 = vmatprep.subr.mxu0 0.0
    %973 = vmatpush1.xpose.msra.mxu0 0.0
    %974 = vmatprep.subr.mxu0 0.0
    %975 = vmatpush1.xpose.msra.mxu0 0.0
    %976 = vmatprep.subr.mxu0 0.0
    %977 = vmatpush1.xpose.msra.mxu0 0.0
    %978 = vmatprep.subr.mxu0 0.0
    %979 = vmatpush1.xpose.msra.mxu0 0.0
    %980 = vmatprep.subr.mxu0 0.0
    %981 = vmatpush1.xpose.msra.mxu0 0.0
    %982 = vmatprep.subr.mxu0 0.0
    %983 = vmatpush1.xpose.msra.mxu0 0.0
    %984 = vmatprep.subr.mxu0 0.0
    %985 = vmatpush1.xpose.msra.mxu0 0.0
    %986 = vmatprep.subr.mxu0 0.0
    %987 = vmatpush1.xpose.msra.mxu0 0.0
    %988 = vmatprep.subr.mxu0 0.0
    %989 = vmatpush1.xpose.msra.mxu0 0.0
    %990 = vmatprep.subr.mxu0 0.0
    %991 = vmatpush1.xpose.msra.mxu0 0.0
    %992 = vmatprep.subr.mxu0 0.0
    %993 = vmatpush1.xpose.msra.mxu0 0.0
    %994 = vmatprep.subr.mxu0 0.0
    %995 = vmatpush1.xpose.msra.mxu0 0.0
    %996 = vmatprep.subr.mxu0 0.0
    %997 = vmatpush1.xpose.msra.mxu0 0.0
    %998 = vmatprep.subr.mxu0 0.0
    %999 = vmatpush1.xpose.msra.mxu0 0.0
    %1000 = vmatprep.subr.mxu0 0.0
    %1001 = vmatpush1.xpose.msra.mxu0 0.0
    %1002 = vmatprep.subr.mxu0 0.0
    %1003 = vmatpush1.xpose.msra.mxu0 0.0
    %1004 = vmatprep.subr.mxu0 0.0
    %1005 = vmatpush1.xpose.msra.mxu0 0.0
    %1006 = vmatprep.subr.mxu0 0.0
    %1007 = vmatpush1.xpose.msra.mxu0 0.0
    %1008 = vmatprep.mubr.f32.mxu0 0.0
    %1009 = vmatmul.mubr.f32.gmra.mrb[0].mxu0 %v940
    %v1010 = vpop.f32.mrb[0].mxu0
    %v1011 = vadd.f32 0.0, %v1010
    %v1012 = vpop.f32.mrb[0].mxu0
    %1013 = vdwg.mxu0
    %v1014 = vmul.f32 %v1011, 0.35355338
    %v1015 = vadd.f32 %v1014, %v502
    %v1016 = vsel %vm421, %v1015, -inf
    %1017 = vmax.xlane.f32.xlu0 %v1016
    %v1018 = vpop.xlane.xlu0 %1017
    %v1019 = vsub.f32 %v1015, %v1018
    %v1020 = vmul.f32 %v1019, 1.442695
    %v1021 = vpow.pop %v1020
    %v1022 = vsel %vm421, %v1021, 0.0
    %1023 = vadd.xlane.f32.xlu0 %v1022
    %v1024 = vpop.xlane.xlu0 %1023
    %v1025 = vrcp.pop %v1024
    %v1026 = vmul.f32 %v1021, %v1025
    %1027 = vrot.lane.b32.xlu0 %v224, 104
    %v1028 = vpop.permute.xlu0 %1027
    %v1031 = vsel %vm421, %v1026, 0
    %1033 = vmatprep.subr.mxu0 0.0
    %1034 = vmatpush1.msra.mxu0 %v1028
    %1035 = vmatprep.subr.mxu0 0.0
    %1036 = vmatpush1.msra.mxu0 0.0
    %1037 = vmatprep.subr.mxu0 0.0
    %1038 = vmatpush1.msra.mxu0 0.0
    %1039 = vmatprep.subr.mxu0 0.0
    %1040 = vmatpush1.msra.mxu0 0.0
    %1041 = vmatprep.subr.mxu0 0.0
    %1042 = vmatpush1.msra.mxu0 0.0
    %1043 = vmatprep.subr.mxu0 0.0
    %1044 = vmatpush1.msra.mxu0 0.0
    %1045 = vmatprep.subr.mxu0 0.0
    %1046 = vmatpush1.msra.mxu0 0.0
    %1047 = vmatprep.subr.mxu0 0.0
    %1048 = vmatpush1.msra.mxu0 0.0
    %1049 = vmatprep.subr.mxu0 0.0
    %1050 = vmatpush1.msra.mxu0 0.0
    %1051 = vmatprep.subr.mxu0 0.0
    %1052 = vmatpush1.msra.mxu0 0.0
    %1053 = vmatprep.subr.mxu0 0.0
    %1054 = vmatpush1.msra.mxu0 0.0
    %1055 = vmatprep.subr.mxu0 0.0
    %1056 = vmatpush1.msra.mxu0 0.0
    %1057 = vmatprep.subr.mxu0 0.0
    %1058 = vmatpush1.msra.mxu0 0.0
    %1059 = vmatprep.subr.mxu0 0.0
    %1060 = vmatpush1.msra.mxu0 0.0
    %1061 = vmatprep.subr.mxu0 0.0
    %1062 = vmatpush1.msra.mxu0 0.0
    %1063 = vmatprep.subr.mxu0 0.0
    %1064 = vmatpush1.msra.mxu0 0.0
    %1065 = vmatprep.subr.mxu0 0.0
    %1066 = vmatpush1.msra.mxu0 0.0
    %1067 = vmatprep.subr.mxu0 0.0
    %1068 = vmatpush1.msra.mxu0 0.0
    %1069 = vmatprep.subr.mxu0 0.0
    %1070 = vmatpush1.msra.mxu0 0.0
    %1071 = vmatprep.subr.mxu0 0.0
    %1072 = vmatpush1.msra.mxu0 0.0
    %1073 = vmatprep.subr.mxu0 0.0
    %1074 = vmatpush1.msra.mxu0 0.0
    %1075 = vmatprep.subr.mxu0 0.0
    %1076 = vmatpush1.msra.mxu0 0.0
    %1077 = vmatprep.subr.mxu0 0.0
    %1078 = vmatpush1.msra.mxu0 0.0
    %1079 = vmatprep.subr.mxu0 0.0
    %1080 = vmatpush1.msra.mxu0 0.0
    %1081 = vmatprep.subr.mxu0 0.0
    %1082 = vmatpush1.msra.mxu0 0.0
    %1083 = vmatprep.subr.mxu0 0.0
    %1084 = vmatpush1.msra.mxu0 0.0
    %1085 = vmatprep.subr.mxu0 0.0
    %1086 = vmatpush1.msra.mxu0 0.0
    %1087 = vmatprep.subr.mxu0 0.0
    %1088 = vmatpush1.msra.mxu0 0.0
    %1089 = vmatprep.subr.mxu0 0.0
    %1090 = vmatpush1.msra.mxu0 0.0
    %1091 = vmatprep.subr.mxu0 0.0
    %1092 = vmatpush1.msra.mxu0 0.0
    %1093 = vmatprep.subr.mxu0 0.0
    %1094 = vmatpush1.msra.mxu0 0.0
    %1095 = vmatprep.subr.mxu0 0.0
    %1096 = vmatpush1.msra.mxu0 0.0
    %1097 = vmatprep.mubr.f32.mxu0 0.0
    %1098 = vmatmul.mubr.f32.gmra.mrb[0].mxu0 %v1031
    %v1099 = vpop.f32.mrb[0].mxu0
    %v1100 = vadd.f32 0.0, %v1099
    %v1101 = vpop.f32.mrb[0].mxu0
    %1102 = vdwg.mxu0
    %1104 = vrot.lane.b32.xlu0 %v1100, 24
    %v1105 = vpop.permute.xlu0 %1104
    %vm1107 = vcmask 261312
    %1108 = vst.msk [vmem:[#allocation2] sm:$0xff] %vm1107, %v1105
    %v1110 = vsel %vm421, %v417, 0
    %v1113 = vsel %vm421, %v323, 0
    %1115 = vmatprep.subr.mxu0 0.0
    %1116 = vmatpush1.xpose.msra.mxu0 %v1113
    %1117 = vmatprep.subr.mxu0 0.0
    %1118 = vmatpush1.xpose.msra.mxu0 0.0
    %1119 = vmatprep.subr.mxu0 0.0
    %1120 = vmatpush1.xpose.msra.mxu0 0.0
    %1121 = vmatprep.subr.mxu0 0.0
    %1122 = vmatpush1.xpose.msra.mxu0 0.0
    %1123 = vmatprep.subr.mxu0 0.0
    %1124 = vmatpush1.xpose.msra.mxu0 0.0
    %1125 = vmatprep.subr.mxu0 0.0
    %1126 = vmatpush1.xpose.msra.mxu0 0.0
    %1127 = vmatprep.subr.mxu0 0.0
    %1128 = vmatpush1.xpose.msra.mxu0 0.0
    %1129 = vmatprep.subr.mxu0 0.0
    %1130 = vmatpush1.xpose.msra.mxu0 0.0
    %1131 = vmatprep.subr.mxu0 0.0
    %1132 = vmatpush1.xpose.msra.mxu0 0.0
    %1133 = vmatprep.subr.mxu0 0.0
    %1134 = vmatpush1.xpose.msra.mxu0 0.0
    %1135 = vmatprep.subr.mxu0 0.0
    %1136 = vmatpush1.xpose.msra.mxu0 0.0
    %1137 = vmatprep.subr.mxu0 0.0
    %1138 = vmatpush1.xpose.msra.mxu0 0.0
    %1139 = vmatprep.subr.mxu0 0.0
    %1140 = vmatpush1.xpose.msra.mxu0 0.0
    %1141 = vmatprep.subr.mxu0 0.0
    %1142 = vmatpush1.xpose.msra.mxu0 0.0
    %1143 = vmatprep.subr.mxu0 0.0
    %1144 = vmatpush1.xpose.msra.mxu0 0.0
    %1145 = vmatprep.subr.mxu0 0.0
    %1146 = vmatpush1.xpose.msra.mxu0 0.0
    %1147 = vmatprep.subr.mxu0 0.0
    %1148 = vmatpush1.xpose.msra.mxu0 0.0
    %1149 = vmatprep.subr.mxu0 0.0
    %1150 = vmatpush1.xpose.msra.mxu0 0.0
    %1151 = vmatprep.subr.mxu0 0.0
    %1152 = vmatpush1.xpose.msra.mxu0 0.0
    %1153 = vmatprep.subr.mxu0 0.0
    %1154 = vmatpush1.xpose.msra.mxu0 0.0
    %1155 = vmatprep.subr.mxu0 0.0
    %1156 = vmatpush1.xpose.msra.mxu0 0.0
    %1157 = vmatprep.subr.mxu0 0.0
    %1158 = vmatpush1.xpose.msra.mxu0 0.0
    %1159 = vmatprep.subr.mxu0 0.0
    %1160 = vmatpush1.xpose.msra.mxu0 0.0
    %1161 = vmatprep.subr.mxu0 0.0
    %1162 = vmatpush1.xpose.msra.mxu0 0.0
    %1163 = vmatprep.subr.mxu0 0.0
    %1164 = vmatpush1.xpose.msra.mxu0 0.0
    %1165 = vmatprep.subr.mxu0 0.0
    %1166 = vmatpush1.xpose.msra.mxu0 0.0
    %1167 = vmatprep.subr.mxu0 0.0
    %1168 = vmatpush1.xpose.msra.mxu0 0.0
    %1169 = vmatprep.subr.mxu0 0.0
    %1170 = vmatpush1.xpose.msra.mxu0 0.0
    %1171 = vmatprep.subr.mxu0 0.0
    %1172 = vmatpush1.xpose.msra.mxu0 0.0
    %1173 = vmatprep.subr.mxu0 0.0
    %1174 = vmatpush1.xpose.msra.mxu0 0.0
    %1175 = vmatprep.subr.mxu0 0.0
    %1176 = vmatpush1.xpose.msra.mxu0 0.0
    %1177 = vmatprep.subr.mxu0 0.0
    %1178 = vmatpush1.xpose.msra.mxu0 0.0
    %1179 = vmatprep.mubr.f32.mxu0 0.0
    %1180 = vmatmul.mubr.f32.gmra.mrb[0].mxu0 %v1110
    %v1181 = vpop.f32.mrb[0].mxu0
    %v1182 = vadd.f32 0.0, %v1181
    %v1183 = vpop.f32.mrb[0].mxu0
    %1184 = vdwg.mxu0
    %v1185 = vmul.f32 %v1182, 0.35355338
    %v1186 = vlaneseq
    %v1187 = vshrl.u32 %v1186, 7
    %v1188 = vsub.s32 1, %v1187
    %v1189 = vrot.slane %v420, %v1188
    %v1190 = vadd.f32 %v1185, %v1189
    %v1191 = vsel %vm421, %v1190, -inf
    %1192 = vmax.xlane.f32.xlu0 %v1191
    %v1193 = vpop.xlane.xlu0 %1192
    %v1194 = vsub.f32 %v1190, %v1193
    %v1195 = vmul.f32 %v1194, 1.442695
    %v1196 = vpow.pop %v1195
    %v1197 = vsel %vm421, %v1196, 0.0
    %1198 = vadd.xlane.f32.xlu0 %v1197
    %v1199 = vpop.xlane.xlu0 %1198
    %v1200 = vrcp.pop %v1199
    %v1201 = vmul.f32 %v1196, %v1200
    %v1203 = vsel %vm421, %v1201, 0
    %1205 = vmatprep.subr.mxu0 0.0
    %1206 = vmatpush1.msra.mxu0 %v229
    %1207 = vmatprep.subr.mxu0 0.0
    %1208 = vmatpush1.msra.mxu0 0.0
    %1209 = vmatprep.subr.mxu0 0.0
    %1210 = vmatpush1.msra.mxu0 0.0
    %1211 = vmatprep.subr.mxu0 0.0
    %1212 = vmatpush1.msra.mxu0 0.0
    %1213 = vmatprep.subr.mxu0 0.0
    %1214 = vmatpush1.msra.mxu0 0.0
    %1215 = vmatprep.subr.mxu0 0.0
    %1216 = vmatpush1.msra.mxu0 0.0
    %1217 = vmatprep.subr.mxu0 0.0
    %1218 = vmatpush1.msra.mxu0 0.0
    %1219 = vmatprep.subr.mxu0 0.0
    %1220 = vmatpush1.msra.mxu0 0.0
    %1221 = vmatprep.subr.mxu0 0.0
    %1222 = vmatpush1.msra.mxu0 0.0
    %1223 = vmatprep.subr.mxu0 0.0
    %1224 = vmatpush1.msra.mxu0 0.0
    %1225 = vmatprep.subr.mxu0 0.0
    %1226 = vmatpush1.msra.mxu0 0.0
    %1227 = vmatprep.subr.mxu0 0.0
    %1228 = vmatpush1.msra.mxu0 0.0
    %1229 = vmatprep.subr.mxu0 0.0
    %1230 = vmatpush1.msra.mxu0 0.0
    %1231 = vmatprep.subr.mxu0 0.0
    %1232 = vmatpush1.msra.mxu0 0.0
    %1233 = vmatprep.subr.mxu0 0.0
    %1234 = vmatpush1.msra.mxu0 0.0
    %1235 = vmatprep.subr.mxu0 0.0
    %1236 = vmatpush1.msra.mxu0 0.0
    %1237 = vmatprep.subr.mxu0 0.0
    %1238 = vmatpush1.msra.mxu0 0.0
    %1239 = vmatprep.subr.mxu0 0.0
    %1240 = vmatpush1.msra.mxu0 0.0
    %1241 = vmatprep.subr.mxu0 0.0
    %1242 = vmatpush1.msra.mxu0 0.0
    %1243 = vmatprep.subr.mxu0 0.0
    %1244 = vmatpush1.msra.mxu0 0.0
    %1245 = vmatprep.subr.mxu0 0.0
    %1246 = vmatpush1.msra.mxu0 0.0
    %1247 = vmatprep.subr.mxu0 0.0
    %1248 = vmatpush1.msra.mxu0 0.0
    %1249 = vmatprep.subr.mxu0 0.0
    %1250 = vmatpush1.msra.mxu0 0.0
    %1251 = vmatprep.subr.mxu0 0.0
    %1252 = vmatpush1.msra.mxu0 0.0
    %1253 = vmatprep.subr.mxu0 0.0
    %1254 = vmatpush1.msra.mxu0 0.0
    %1255 = vmatprep.subr.mxu0 0.0
    %1256 = vmatpush1.msra.mxu0 0.0
    %1257 = vmatprep.subr.mxu0 0.0
    %1258 = vmatpush1.msra.mxu0 0.0
    %1259 = vmatprep.subr.mxu0 0.0
    %1260 = vmatpush1.msra.mxu0 0.0
    %1261 = vmatprep.subr.mxu0 0.0
    %1262 = vmatpush1.msra.mxu0 0.0
    %1263 = vmatprep.subr.mxu0 0.0
    %1264 = vmatpush1.msra.mxu0 0.0
    %1265 = vmatprep.subr.mxu0 0.0
    %1266 = vmatpush1.msra.mxu0 0.0
    %1267 = vmatprep.subr.mxu0 0.0
    %1268 = vmatpush1.msra.mxu0 0.0
    %1269 = vmatprep.mubr.f32.mxu0 0.0
    %1270 = vmatmul.mubr.f32.gmra.mrb[0].mxu0 %v1203
    %v1271 = vpop.f32.mrb[0].mxu0
    %v1272 = vadd.f32 0.0, %v1271
    %v1273 = vpop.f32.mrb[0].mxu0
    %1274 = vdwg.mxu0
    %1275 = vst.msk [vmem:[#allocation2 + $0x8] sm:$0xff] %vm421, %v1272
    %1276 = vrot.lane.b32.xlu0 %v417, 120
    %v1277 = vpop.permute.xlu0 %1276
    %1278 = vrot.lane.b32.xlu0 %v323, 120
    %v1279 = vpop.permute.xlu0 %1278
    %v1280 = vsel %vm421, %v1277, 0
    %v1282 = vsel %vm421, %v1279, 0
    %1284 = vmatprep.subr.mxu0 0.0
    %1285 = vmatpush1.xpose.msra.mxu0 %v1282
    %1286 = vmatprep.subr.mxu0 0.0
    %1287 = vmatpush1.xpose.msra.mxu0 0.0
    %1288 = vmatprep.subr.mxu0 0.0
    %1289 = vmatpush1.xpose.msra.mxu0 0.0
    %1290 = vmatprep.subr.mxu0 0.0
    %1291 = vmatpush1.xpose.msra.mxu0 0.0
    %1292 = vmatprep.subr.mxu0 0.0
    %1293 = vmatpush1.xpose.msra.mxu0 0.0
    %1294 = vmatprep.subr.mxu0 0.0
    %1295 = vmatpush1.xpose.msra.mxu0 0.0
    %1296 = vmatprep.subr.mxu0 0.0
    %1297 = vmatpush1.xpose.msra.mxu0 0.0
    %1298 = vmatprep.subr.mxu0 0.0
    %1299 = vmatpush1.xpose.msra.mxu0 0.0
    %1300 = vmatprep.subr.mxu0 0.0
    %1301 = vmatpush1.xpose.msra.mxu0 0.0
    %1302 = vmatprep.subr.mxu0 0.0
    %1303 = vmatpush1.xpose.msra.mxu0 0.0
    %1304 = vmatprep.subr.mxu0 0.0
    %1305 = vmatpush1.xpose.msra.mxu0 0.0
    %1306 = vmatprep.subr.mxu0 0.0
    %1307 = vmatpush1.xpose.msra.mxu0 0.0
    %1308 = vmatprep.subr.mxu0 0.0
    %1309 = vmatpush1.xpose.msra.mxu0 0.0
    %1310 = vmatprep.subr.mxu0 0.0
    %1311 = vmatpush1.xpose.msra.mxu0 0.0
    %1312 = vmatprep.subr.mxu0 0.0
    %1313 = vmatpush1.xpose.msra.mxu0 0.0
    %1314 = vmatprep.subr.mxu0 0.0
    %1315 = vmatpush1.xpose.msra.mxu0 0.0
    %1316 = vmatprep.subr.mxu0 0.0
    %1317 = vmatpush1.xpose.msra.mxu0 0.0
    %1318 = vmatprep.subr.mxu0 0.0
    %1319 = vmatpush1.xpose.msra.mxu0 0.0
    %1320 = vmatprep.subr.mxu0 0.0
    %1321 = vmatpush1.xpose.msra.mxu0 0.0
    %1322 = vmatprep.subr.mxu0 0.0
    %1323 = vmatpush1.xpose.msra.mxu0 0.0
    %1324 = vmatprep.subr.mxu0 0.0
    %1325 = vmatpush1.xpose.msra.mxu0 0.0
    %1326 = vmatprep.subr.mxu0 0.0
    %1327 = vmatpush1.xpose.msra.mxu0 0.0
    %1328 = vmatprep.subr.mxu0 0.0
    %1329 = vmatpush1.xpose.msra.mxu0 0.0
    %1330 = vmatprep.subr.mxu0 0.0
    %1331 = vmatpush1.xpose.msra.mxu0 0.0
    %1332 = vmatprep.subr.mxu0 0.0
    %1333 = vmatpush1.xpose.msra.mxu0 0.0
    %1334 = vmatprep.subr.mxu0 0.0
    %1335 = vmatpush1.xpose.msra.mxu0 0.0
    %1336 = vmatprep.subr.mxu0 0.0
    %1337 = vmatpush1.xpose.msra.mxu0 0.0
    %1338 = vmatprep.subr.mxu0 0.0
    %1339 = vmatpush1.xpose.msra.mxu0 0.0
    %1340 = vmatprep.subr.mxu0 0.0
    %1341 = vmatpush1.xpose.msra.mxu0 0.0
    %1342 = vmatprep.subr.mxu0 0.0
    %1343 = vmatpush1.xpose.msra.mxu0 0.0
    %1344 = vmatprep.subr.mxu0 0.0
    %1345 = vmatpush1.xpose.msra.mxu0 0.0
    %1346 = vmatprep.subr.mxu0 0.0
    %1347 = vmatpush1.xpose.msra.mxu0 0.0
    %1348 = vmatprep.mubr.f32.mxu0 0.0
    %1349 = vmatmul.mubr.f32.gmra.mrb[0].mxu0 %v1280
    %v1350 = vpop.f32.mrb[0].mxu0
    %v1351 = vadd.f32 0.0, %v1350
    %v1352 = vpop.f32.mrb[0].mxu0
    %1353 = vdwg.mxu0
    %v1354 = vmul.f32 %v1351, 0.35355338
    %v1355 = vadd.f32 %v1354, %v1189
    %v1356 = vsel %vm421, %v1355, -inf
    %1357 = vmax.xlane.f32.xlu0 %v1356
    %v1358 = vpop.xlane.xlu0 %1357
    %v1359 = vsub.f32 %v1355, %v1358
    %v1360 = vmul.f32 %v1359, 1.442695
    %v1361 = vpow.pop %v1360
    %v1362 = vsel %vm421, %v1361, 0.0
    %1363 = vadd.xlane.f32.xlu0 %v1362
    %v1364 = vpop.xlane.xlu0 %1363
    %v1365 = vrcp.pop %v1364
    %v1366 = vmul.f32 %v1361, %v1365
    %1368 = vrot.lane.b32.xlu0 %v229, 120
    %v1369 = vpop.permute.xlu0 %1368
    %v1372 = vsel %vm421, %v1366, 0
    %1374 = vmatprep.subr.mxu0 0.0
    %1375 = vmatpush1.msra.mxu0 %v1369
    %1376 = vmatprep.subr.mxu0 0.0
    %1377 = vmatpush1.msra.mxu0 0.0
    %1378 = vmatprep.subr.mxu0 0.0
    %1379 = vmatpush1.msra.mxu0 0.0
    %1380 = vmatprep.subr.mxu0 0.0
    %1381 = vmatpush1.msra.mxu0 0.0
    %1382 = vmatprep.subr.mxu0 0.0
    %1383 = vmatpush1.msra.mxu0 0.0
    %1384 = vmatprep.subr.mxu0 0.0
    %1385 = vmatpush1.msra.mxu0 0.0
    %1386 = vmatprep.subr.mxu0 0.0
    %1387 = vmatpush1.msra.mxu0 0.0
    %1388 = vmatprep.subr.mxu0 0.0
    %1389 = vmatpush1.msra.mxu0 0.0
    %1390 = vmatprep.subr.mxu0 0.0
    %1391 = vmatpush1.msra.mxu0 0.0
    %1392 = vmatprep.subr.mxu0 0.0
    %1393 = vmatpush1.msra.mxu0 0.0
    %1394 = vmatprep.subr.mxu0 0.0
    %1395 = vmatpush1.msra.mxu0 0.0
    %1396 = vmatprep.subr.mxu0 0.0
    %1397 = vmatpush1.msra.mxu0 0.0
    %1398 = vmatprep.subr.mxu0 0.0
    %1399 = vmatpush1.msra.mxu0 0.0
    %1400 = vmatprep.subr.mxu0 0.0
    %1401 = vmatpush1.msra.mxu0 0.0
    %1402 = vmatprep.subr.mxu0 0.0
    %1403 = vmatpush1.msra.mxu0 0.0
    %1404 = vmatprep.subr.mxu0 0.0
    %1405 = vmatpush1.msra.mxu0 0.0
    %1406 = vmatprep.subr.mxu0 0.0
    %1407 = vmatpush1.msra.mxu0 0.0
    %1408 = vmatprep.subr.mxu0 0.0
    %1409 = vmatpush1.msra.mxu0 0.0
    %1410 = vmatprep.subr.mxu0 0.0
    %1411 = vmatpush1.msra.mxu0 0.0
    %1412 = vmatprep.subr.mxu0 0.0
    %1413 = vmatpush1.msra.mxu0 0.0
    %1414 = vmatprep.subr.mxu0 0.0
    %1415 = vmatpush1.msra.mxu0 0.0
    %1416 = vmatprep.subr.mxu0 0.0
    %1417 = vmatpush1.msra.mxu0 0.0
    %1418 = vmatprep.subr.mxu0 0.0
    %1419 = vmatpush1.msra.mxu0 0.0
    %1420 = vmatprep.subr.mxu0 0.0
    %1421 = vmatpush1.msra.mxu0 0.0
    %1422 = vmatprep.subr.mxu0 0.0
    %1423 = vmatpush1.msra.mxu0 0.0
    %1424 = vmatprep.subr.mxu0 0.0
    %1425 = vmatpush1.msra.mxu0 0.0
    %1426 = vmatprep.subr.mxu0 0.0
    %1427 = vmatpush1.msra.mxu0 0.0
    %1428 = vmatprep.subr.mxu0 0.0
    %1429 = vmatpush1.msra.mxu0 0.0
    %1430 = vmatprep.subr.mxu0 0.0
    %1431 = vmatpush1.msra.mxu0 0.0
    %1432 = vmatprep.subr.mxu0 0.0
    %1433 = vmatpush1.msra.mxu0 0.0
    %1434 = vmatprep.subr.mxu0 0.0
    %1435 = vmatpush1.msra.mxu0 0.0
    %1436 = vmatprep.subr.mxu0 0.0
    %1437 = vmatpush1.msra.mxu0 0.0
    %1438 = vmatprep.mubr.f32.mxu0 0.0
    %1439 = vmatmul.mubr.f32.gmra.mrb[0].mxu0 %v1372
    %v1440 = vpop.f32.mrb[0].mxu0
    %v1441 = vadd.f32 0.0, %v1440
    %v1442 = vpop.f32.mrb[0].mxu0
    %1443 = vdwg.mxu0
    %1445 = vrot.lane.b32.xlu0 %v1441, 8
    %v1446 = vpop.permute.xlu0 %1445
    %1448 = vst.msk [vmem:[#allocation2 + $0x8] sm:$0xff] %vm761, %v1446
    %1449 = vrot.lane.b32.xlu0 %v417, 112
    %v1450 = vpop.permute.xlu0 %1449
    %1451 = vrot.lane.b32.xlu0 %v323, 112
    %v1452 = vpop.permute.xlu0 %1451
    %v1453 = vsel %vm421, %v1450, 0
    %v1455 = vsel %vm421, %v1452, 0
    %1457 = vmatprep.subr.mxu0 0.0
    %1458 = vmatpush1.xpose.msra.mxu0 %v1455
    %1459 = vmatprep.subr.mxu0 0.0
    %1460 = vmatpush1.xpose.msra.mxu0 0.0
    %1461 = vmatprep.subr.mxu0 0.0
    %1462 = vmatpush1.xpose.msra.mxu0 0.0
    %1463 = vmatprep.subr.mxu0 0.0
    %1464 = vmatpush1.xpose.msra.mxu0 0.0
    %1465 = vmatprep.subr.mxu0 0.0
    %1466 = vmatpush1.xpose.msra.mxu0 0.0
    %1467 = vmatprep.subr.mxu0 0.0
    %1468 = vmatpush1.xpose.msra.mxu0 0.0
    %1469 = vmatprep.subr.mxu0 0.0
    %1470 = vmatpush1.xpose.msra.mxu0 0.0
    %1471 = vmatprep.subr.mxu0 0.0
    %1472 = vmatpush1.xpose.msra.mxu0 0.0
    %1473 = vmatprep.subr.mxu0 0.0
    %1474 = vmatpush1.xpose.msra.mxu0 0.0
    %1475 = vmatprep.subr.mxu0 0.0
    %1476 = vmatpush1.xpose.msra.mxu0 0.0
    %1477 = vmatprep.subr.mxu0 0.0
    %1478 = vmatpush1.xpose.msra.mxu0 0.0
    %1479 = vmatprep.subr.mxu0 0.0
    %1480 = vmatpush1.xpose.msra.mxu0 0.0
    %1481 = vmatprep.subr.mxu0 0.0
    %1482 = vmatpush1.xpose.msra.mxu0 0.0
    %1483 = vmatprep.subr.mxu0 0.0
    %1484 = vmatpush1.xpose.msra.mxu0 0.0
    %1485 = vmatprep.subr.mxu0 0.0
    %1486 = vmatpush1.xpose.msra.mxu0 0.0
    %1487 = vmatprep.subr.mxu0 0.0
    %1488 = vmatpush1.xpose.msra.mxu0 0.0
    %1489 = vmatprep.subr.mxu0 0.0
    %1490 = vmatpush1.xpose.msra.mxu0 0.0
    %1491 = vmatprep.subr.mxu0 0.0
    %1492 = vmatpush1.xpose.msra.mxu0 0.0
    %1493 = vmatprep.subr.mxu0 0.0
    %1494 = vmatpush1.xpose.msra.mxu0 0.0
    %1495 = vmatprep.subr.mxu0 0.0
    %1496 = vmatpush1.xpose.msra.mxu0 0.0
    %1497 = vmatprep.subr.mxu0 0.0
    %1498 = vmatpush1.xpose.msra.mxu0 0.0
    %1499 = vmatprep.subr.mxu0 0.0
    %1500 = vmatpush1.xpose.msra.mxu0 0.0
    %1501 = vmatprep.subr.mxu0 0.0
    %1502 = vmatpush1.xpose.msra.mxu0 0.0
    %1503 = vmatprep.subr.mxu0 0.0
    %1504 = vmatpush1.xpose.msra.mxu0 0.0
    %1505 = vmatprep.subr.mxu0 0.0
    %1506 = vmatpush1.xpose.msra.mxu0 0.0
    %1507 = vmatprep.subr.mxu0 0.0
    %1508 = vmatpush1.xpose.msra.mxu0 0.0
    %1509 = vmatprep.subr.mxu0 0.0
    %1510 = vmatpush1.xpose.msra.mxu0 0.0
    %1511 = vmatprep.subr.mxu0 0.0
    %1512 = vmatpush1.xpose.msra.mxu0 0.0
    %1513 = vmatprep.subr.mxu0 0.0
    %1514 = vmatpush1.xpose.msra.mxu0 0.0
    %1515 = vmatprep.subr.mxu0 0.0
    %1516 = vmatpush1.xpose.msra.mxu0 0.0
    %1517 = vmatprep.subr.mxu0 0.0
    %1518 = vmatpush1.xpose.msra.mxu0 0.0
    %1519 = vmatprep.subr.mxu0 0.0
    %1520 = vmatpush1.xpose.msra.mxu0 0.0
    %1521 = vmatprep.mubr.f32.mxu0 0.0
    %1522 = vmatmul.mubr.f32.gmra.mrb[0].mxu0 %v1453
    %v1523 = vpop.f32.mrb[0].mxu0
    %v1524 = vadd.f32 0.0, %v1523
    %v1525 = vpop.f32.mrb[0].mxu0
    %1526 = vdwg.mxu0
    %v1527 = vmul.f32 %v1524, 0.35355338
    %v1528 = vadd.f32 %v1527, %v1189
    %v1529 = vsel %vm421, %v1528, -inf
    %1530 = vmax.xlane.f32.xlu0 %v1529
    %v1531 = vpop.xlane.xlu0 %1530
    %v1532 = vsub.f32 %v1528, %v1531
    %v1533 = vmul.f32 %v1532, 1.442695
    %v1534 = vpow.pop %v1533
    %v1535 = vsel %vm421, %v1534, 0.0
    %1536 = vadd.xlane.f32.xlu0 %v1535
    %v1537 = vpop.xlane.xlu0 %1536
    %v1538 = vrcp.pop %v1537
    %v1539 = vmul.f32 %v1534, %v1538
    %1540 = vrot.lane.b32.xlu0 %v229, 112
    %v1541 = vpop.permute.xlu0 %1540
    %v1544 = vsel %vm421, %v1539, 0
    %1546 = vmatprep.subr.mxu0 0.0
    %1547 = vmatpush1.msra.mxu0 %v1541
    %1548 = vmatprep.subr.mxu0 0.0
    %1549 = vmatpush1.msra.mxu0 0.0
    %1550 = vmatprep.subr.mxu0 0.0
    %1551 = vmatpush1.msra.mxu0 0.0
    %1552 = vmatprep.subr.mxu0 0.0
    %1553 = vmatpush1.msra.mxu0 0.0
    %1554 = vmatprep.subr.mxu0 0.0
    %1555 = vmatpush1.msra.mxu0 0.0
    %1556 = vmatprep.subr.mxu0 0.0
    %1557 = vmatpush1.msra.mxu0 0.0
    %1558 = vmatprep.subr.mxu0 0.0
    %1559 = vmatpush1.msra.mxu0 0.0
    %1560 = vmatprep.subr.mxu0 0.0
    %1561 = vmatpush1.msra.mxu0 0.0
    %1562 = vmatprep.subr.mxu0 0.0
    %1563 = vmatpush1.msra.mxu0 0.0
    %1564 = vmatprep.subr.mxu0 0.0
    %1565 = vmatpush1.msra.mxu0 0.0
    %1566 = vmatprep.subr.mxu0 0.0
    %1567 = vmatpush1.msra.mxu0 0.0
    %1568 = vmatprep.subr.mxu0 0.0
    %1569 = vmatpush1.msra.mxu0 0.0
    %1570 = vmatprep.subr.mxu0 0.0
    %1571 = vmatpush1.msra.mxu0 0.0
    %1572 = vmatprep.subr.mxu0 0.0
    %1573 = vmatpush1.msra.mxu0 0.0
    %1574 = vmatprep.subr.mxu0 0.0
    %1575 = vmatpush1.msra.mxu0 0.0
    %1576 = vmatprep.subr.mxu0 0.0
    %1577 = vmatpush1.msra.mxu0 0.0
    %1578 = vmatprep.subr.mxu0 0.0
    %1579 = vmatpush1.msra.mxu0 0.0
    %1580 = vmatprep.subr.mxu0 0.0
    %1581 = vmatpush1.msra.mxu0 0.0
    %1582 = vmatprep.subr.mxu0 0.0
    %1583 = vmatpush1.msra.mxu0 0.0
    %1584 = vmatprep.subr.mxu0 0.0
    %1585 = vmatpush1.msra.mxu0 0.0
    %1586 = vmatprep.subr.mxu0 0.0
    %1587 = vmatpush1.msra.mxu0 0.0
    %1588 = vmatprep.subr.mxu0 0.0
    %1589 = vmatpush1.msra.mxu0 0.0
    %1590 = vmatprep.subr.mxu0 0.0
    %1591 = vmatpush1.msra.mxu0 0.0
    %1592 = vmatprep.subr.mxu0 0.0
    %1593 = vmatpush1.msra.mxu0 0.0
    %1594 = vmatprep.subr.mxu0 0.0
    %1595 = vmatpush1.msra.mxu0 0.0
    %1596 = vmatprep.subr.mxu0 0.0
    %1597 = vmatpush1.msra.mxu0 0.0
    %1598 = vmatprep.subr.mxu0 0.0
    %1599 = vmatpush1.msra.mxu0 0.0
    %1600 = vmatprep.subr.mxu0 0.0
    %1601 = vmatpush1.msra.mxu0 0.0
    %1602 = vmatprep.subr.mxu0 0.0
    %1603 = vmatpush1.msra.mxu0 0.0
    %1604 = vmatprep.subr.mxu0 0.0
    %1605 = vmatpush1.msra.mxu0 0.0
    %1606 = vmatprep.subr.mxu0 0.0
    %1607 = vmatpush1.msra.mxu0 0.0
    %1608 = vmatprep.subr.mxu0 0.0
    %1609 = vmatpush1.msra.mxu0 0.0
    %1610 = vmatprep.mubr.f32.mxu0 0.0
    %1611 = vmatmul.mubr.f32.gmra.mrb[0].mxu0 %v1544
    %v1612 = vpop.f32.mrb[0].mxu0
    %v1613 = vadd.f32 0.0, %v1612
    %v1614 = vpop.f32.mrb[0].mxu0
    %1615 = vdwg.mxu0
    %1617 = vrot.lane.b32.xlu0 %v1613, 16
    %v1618 = vpop.permute.xlu0 %1617
    %1620 = vst.msk [vmem:[#allocation2 + $0x8] sm:$0xff] %vm934, %v1618
    %1621 = vrot.lane.b32.xlu0 %v417, 104
    %v1622 = vpop.permute.xlu0 %1621
    %1623 = vrot.lane.b32.xlu0 %v323, 104
    %v1624 = vpop.permute.xlu0 %1623
    %v1625 = vsel %vm421, %v1622, 0
    %v1627 = vsel %vm421, %v1624, 0
    %1629 = vmatprep.subr.mxu0 0.0
    %1630 = vmatpush1.xpose.msra.mxu0 %v1627
    %1631 = vmatprep.subr.mxu0 0.0
    %1632 = vmatpush1.xpose.msra.mxu0 0.0
    %1633 = vmatprep.subr.mxu0 0.0
    %1634 = vmatpush1.xpose.msra.mxu0 0.0
    %1635 = vmatprep.subr.mxu0 0.0
    %1636 = vmatpush1.xpose.msra.mxu0 0.0
    %1637 = vmatprep.subr.mxu0 0.0
    %1638 = vmatpush1.xpose.msra.mxu0 0.0
    %1639 = vmatprep.subr.mxu0 0.0
    %1640 = vmatpush1.xpose.msra.mxu0 0.0
    %1641 = vmatprep.subr.mxu0 0.0
    %1642 = vmatpush1.xpose.msra.mxu0 0.0
    %1643 = vmatprep.subr.mxu0 0.0
    %1644 = vmatpush1.xpose.msra.mxu0 0.0
    %1645 = vmatprep.subr.mxu0 0.0
    %1646 = vmatpush1.xpose.msra.mxu0 0.0
    %1647 = vmatprep.subr.mxu0 0.0
    %1648 = vmatpush1.xpose.msra.mxu0 0.0
    %1649 = vmatprep.subr.mxu0 0.0
    %1650 = vmatpush1.xpose.msra.mxu0 0.0
    %1651 = vmatprep.subr.mxu0 0.0
    %1652 = vmatpush1.xpose.msra.mxu0 0.0
    %1653 = vmatprep.subr.mxu0 0.0
    %1654 = vmatpush1.xpose.msra.mxu0 0.0
    %1655 = vmatprep.subr.mxu0 0.0
    %1656 = vmatpush1.xpose.msra.mxu0 0.0
    %1657 = vmatprep.subr.mxu0 0.0
    %1658 = vmatpush1.xpose.msra.mxu0 0.0
    %1659 = vmatprep.subr.mxu0 0.0
    %1660 = vmatpush1.xpose.msra.mxu0 0.0
    %1661 = vmatprep.subr.mxu0 0.0
    %1662 = vmatpush1.xpose.msra.mxu0 0.0
    %1663 = vmatprep.subr.mxu0 0.0
    %1664 = vmatpush1.xpose.msra.mxu0 0.0
    %1665 = vmatprep.subr.mxu0 0.0
    %1666 = vmatpush1.xpose.msra.mxu0 0.0
    %1667 = vmatprep.subr.mxu0 0.0
    %1668 = vmatpush1.xpose.msra.mxu0 0.0
    %1669 = vmatprep.subr.mxu0 0.0
    %1670 = vmatpush1.xpose.msra.mxu0 0.0
    %1671 = vmatprep.subr.mxu0 0.0
    %1672 = vmatpush1.xpose.msra.mxu0 0.0
    %1673 = vmatprep.subr.mxu0 0.0
    %1674 = vmatpush1.xpose.msra.mxu0 0.0
    %1675 = vmatprep.subr.mxu0 0.0
    %1676 = vmatpush1.xpose.msra.mxu0 0.0
    %1677 = vmatprep.subr.mxu0 0.0
    %1678 = vmatpush1.xpose.msra.mxu0 0.0
    %1679 = vmatprep.subr.mxu0 0.0
    %1680 = vmatpush1.xpose.msra.mxu0 0.0
    %1681 = vmatprep.subr.mxu0 0.0
    %1682 = vmatpush1.xpose.msra.mxu0 0.0
    %1683 = vmatprep.subr.mxu0 0.0
    %1684 = vmatpush1.xpose.msra.mxu0 0.0
    %1685 = vmatprep.subr.mxu0 0.0
    %1686 = vmatpush1.xpose.msra.mxu0 0.0
    %1687 = vmatprep.subr.mxu0 0.0
    %1688 = vmatpush1.xpose.msra.mxu0 0.0
    %1689 = vmatprep.subr.mxu0 0.0
    %1690 = vmatpush1.xpose.msra.mxu0 0.0
    %1691 = vmatprep.subr.mxu0 0.0
    %1692 = vmatpush1.xpose.msra.mxu0 0.0
    %1693 = vmatprep.mubr.f32.mxu0 0.0
    %1694 = vmatmul.mubr.f32.gmra.mrb[0].mxu0 %v1625
    %v1695 = vpop.f32.mrb[0].mxu0
    %v1696 = vadd.f32 0.0, %v1695
    %v1697 = vpop.f32.mrb[0].mxu0
    %1698 = vdwg.mxu0
    %v1699 = vmul.f32 %v1696, 0.35355338
    %v1700 = vadd.f32 %v1699, %v1189
    %v1701 = vsel %vm421, %v1700, -inf
    %1702 = vmax.xlane.f32.xlu0 %v1701
    %v1703 = vpop.xlane.xlu0 %1702
    %v1704 = vsub.f32 %v1700, %v1703
    %v1705 = vmul.f32 %v1704, 1.442695
    %v1706 = vpow.pop %v1705
    %v1707 = vsel %vm421, %v1706, 0.0
    %1708 = vadd.xlane.f32.xlu0 %v1707
    %v1709 = vpop.xlane.xlu0 %1708
    %v1710 = vrcp.pop %v1709
    %v1711 = vmul.f32 %v1706, %v1710
    %1712 = vrot.lane.b32.xlu0 %v229, 104
    %v1713 = vpop.permute.xlu0 %1712
    %v1716 = vsel %vm421, %v1711, 0
    %1718 = vmatprep.subr.mxu0 0.0
    %1719 = vmatpush1.msra.mxu0 %v1713
    %1720 = vmatprep.subr.mxu0 0.0
    %1721 = vmatpush1.msra.mxu0 0.0
    %1722 = vmatprep.subr.mxu0 0.0
    %1723 = vmatpush1.msra.mxu0 0.0
    %1724 = vmatprep.subr.mxu0 0.0
    %1725 = vmatpush1.msra.mxu0 0.0
    %1726 = vmatprep.subr.mxu0 0.0
    %1727 = vmatpush1.msra.mxu0 0.0
    %1728 = vmatprep.subr.mxu0 0.0
    %1729 = vmatpush1.msra.mxu0 0.0
    %1730 = vmatprep.subr.mxu0 0.0
    %1731 = vmatpush1.msra.mxu0 0.0
    %1732 = vmatprep.subr.mxu0 0.0
    %1733 = vmatpush1.msra.mxu0 0.0
    %1734 = vmatprep.subr.mxu0 0.0
    %1735 = vmatpush1.msra.mxu0 0.0
    %1736 = vmatprep.subr.mxu0 0.0
    %1737 = vmatpush1.msra.mxu0 0.0
    %1738 = vmatprep.subr.mxu0 0.0
    %1739 = vmatpush1.msra.mxu0 0.0
    %1740 = vmatprep.subr.mxu0 0.0
    %1741 = vmatpush1.msra.mxu0 0.0
    %1742 = vmatprep.subr.mxu0 0.0
    %1743 = vmatpush1.msra.mxu0 0.0
    %1744 = vmatprep.subr.mxu0 0.0
    %1745 = vmatpush1.msra.mxu0 0.0
    %1746 = vmatprep.subr.mxu0 0.0
    %1747 = vmatpush1.msra.mxu0 0.0
    %1748 = vmatprep.subr.mxu0 0.0
    %1749 = vmatpush1.msra.mxu0 0.0
    %1750 = vmatprep.subr.mxu0 0.0
    %1751 = vmatpush1.msra.mxu0 0.0
    %1752 = vmatprep.subr.mxu0 0.0
    %1753 = vmatpush1.msra.mxu0 0.0
    %1754 = vmatprep.subr.mxu0 0.0
    %1755 = vmatpush1.msra.mxu0 0.0
    %1756 = vmatprep.subr.mxu0 0.0
    %1757 = vmatpush1.msra.mxu0 0.0
    %1758 = vmatprep.subr.mxu0 0.0
    %1759 = vmatpush1.msra.mxu0 0.0
    %1760 = vmatprep.subr.mxu0 0.0
    %1761 = vmatpush1.msra.mxu0 0.0
    %1762 = vmatprep.subr.mxu0 0.0
    %1763 = vmatpush1.msra.mxu0 0.0
    %1764 = vmatprep.subr.mxu0 0.0
    %1765 = vmatpush1.msra.mxu0 0.0
    %1766 = vmatprep.subr.mxu0 0.0
    %1767 = vmatpush1.msra.mxu0 0.0
    %1768 = vmatprep.subr.mxu0 0.0
    %1769 = vmatpush1.msra.mxu0 0.0
    %1770 = vmatprep.subr.mxu0 0.0
    %1771 = vmatpush1.msra.mxu0 0.0
    %1772 = vmatprep.subr.mxu0 0.0
    %1773 = vmatpush1.msra.mxu0 0.0
    %1774 = vmatprep.subr.mxu0 0.0
    %1775 = vmatpush1.msra.mxu0 0.0
    %1776 = vmatprep.subr.mxu0 0.0
    %1777 = vmatpush1.msra.mxu0 0.0
    %1778 = vmatprep.subr.mxu0 0.0
    %1779 = vmatpush1.msra.mxu0 0.0
    %1780 = vmatprep.subr.mxu0 0.0
    %1781 = vmatpush1.msra.mxu0 0.0
    %1782 = vmatprep.mubr.f32.mxu0 0.0
    %1783 = vmatmul.mubr.f32.gmra.mrb[0].mxu0 %v1716
    %v1784 = vpop.f32.mrb[0].mxu0
    %v1785 = vadd.f32 0.0, %v1784
    %v1786 = vpop.f32.mrb[0].mxu0
    %1787 = vdwg.mxu0
    %1789 = vrot.lane.b32.xlu0 %v1785, 24
    %v1790 = vpop.permute.xlu0 %1789
    %1792 = vst.msk [vmem:[#allocation2 + $0x8] sm:$0xff] %vm1107, %v1790
    %v1793 = vld [vmem:[#allocation2] sm:$0xff]
    %v1794 = vld [vmem:[#allocation2 + $0x8] sm:$0xff]
    %v1795 = vld [vmem:[#allocation14] sm:$0xff]
    %v1796 = vld [vmem:[#allocation14 + $0x8] sm:$0xff]
    %v1797 = vld [vmem:[#allocation14 + $0x10] sm:$0xff]
    %v1798 = vld [vmem:[#allocation14 + $0x18] sm:$0xff]
    %v1799 = vld [vmem:[%s11] sm:$0x1]
    %v1801 = vlaneseq
    %v1802 = vshrl.u32 %v1801, 7
    %v1803 = vsub.s32 0, %v1802
    %v1804 = vrot.slane %v1799, %v1803
    %v1807 = vsel %vm150, %v1793, 0
    %v1810 = vsel %vm150, %v1794, 0
    %1812 = vmatprep.subr.mxu0 0.0
    %1813 = vmatpush1.msra.mxu0 %v1795
    %1814 = vmatprep.subr.mxu0 0.0
    %1815 = vmatpush1.msra.mxu0 %v1796
    %1816 = vmatprep.subr.mxu0 0.0
    %1817 = vmatpush1.msra.mxu0 %v1797
    %1818 = vmatprep.subr.mxu0 0.0
    %1819 = vmatpush1.msra.mxu0 %v1798
    %1820 = vmatprep.subr.mxu0 0.0
    %1821 = vmatpush1.msra.mxu0 0.0
    %1822 = vmatprep.subr.mxu0 0.0
    %1823 = vmatpush1.msra.mxu0 0.0
    %1824 = vmatprep.subr.mxu0 0.0
    %1825 = vmatpush1.msra.mxu0 0.0
    %1826 = vmatprep.subr.mxu0 0.0
    %1827 = vmatpush1.msra.mxu0 0.0
    %1828 = vmatprep.subr.mxu0 0.0
    %1829 = vmatpush1.msra.mxu0 0.0
    %1830 = vmatprep.subr.mxu0 0.0
    %1831 = vmatpush1.msra.mxu0 0.0
    %1832 = vmatprep.subr.mxu0 0.0
    %1833 = vmatpush1.msra.mxu0 0.0
    %1834 = vmatprep.subr.mxu0 0.0
    %1835 = vmatpush1.msra.mxu0 0.0
    %1836 = vmatprep.subr.mxu0 0.0
    %1837 = vmatpush1.msra.mxu0 0.0
    %1838 = vmatprep.subr.mxu0 0.0
    %1839 = vmatpush1.msra.mxu0 0.0
    %1840 = vmatprep.subr.mxu0 0.0
    %1841 = vmatpush1.msra.mxu0 0.0
    %1842 = vmatprep.subr.mxu0 0.0
    %1843 = vmatpush1.msra.mxu0 0.0
    %1844 = vmatprep.subr.mxu0 0.0
    %1845 = vmatpush1.msra.mxu0 0.0
    %1846 = vmatprep.subr.mxu0 0.0
    %1847 = vmatpush1.msra.mxu0 0.0
    %1848 = vmatprep.subr.mxu0 0.0
    %1849 = vmatpush1.msra.mxu0 0.0
    %1850 = vmatprep.subr.mxu0 0.0
    %1851 = vmatpush1.msra.mxu0 0.0
    %1852 = vmatprep.subr.mxu0 0.0
    %1853 = vmatpush1.msra.mxu0 0.0
    %1854 = vmatprep.subr.mxu0 0.0
    %1855 = vmatpush1.msra.mxu0 0.0
    %1856 = vmatprep.subr.mxu0 0.0
    %1857 = vmatpush1.msra.mxu0 0.0
    %1858 = vmatprep.subr.mxu0 0.0
    %1859 = vmatpush1.msra.mxu0 0.0
    %1860 = vmatprep.subr.mxu0 0.0
    %1861 = vmatpush1.msra.mxu0 0.0
    %1862 = vmatprep.subr.mxu0 0.0
    %1863 = vmatpush1.msra.mxu0 0.0
    %1864 = vmatprep.subr.mxu0 0.0
    %1865 = vmatpush1.msra.mxu0 0.0
    %1866 = vmatprep.subr.mxu0 0.0
    %1867 = vmatpush1.msra.mxu0 0.0
    %1868 = vmatprep.subr.mxu0 0.0
    %1869 = vmatpush1.msra.mxu0 0.0
    %1870 = vmatprep.subr.mxu0 0.0
    %1871 = vmatpush1.msra.mxu0 0.0
    %1872 = vmatprep.subr.mxu0 0.0
    %1873 = vmatpush1.msra.mxu0 0.0
    %1874 = vmatprep.subr.mxu0 0.0
    %1875 = vmatpush1.msra.mxu0 0.0
    %1876 = vmatprep.mubr.f32.mxu0 0.0
    %1877 = vmatmul.mubr.f32.gmra.mrb[0].mxu0 %v1807
    %v1878 = vpop.f32.mrb[0].mxu0
    %v1879 = vadd.f32 %v1804, %v1878
    %v1880 = vpop.f32.mrb[0].mxu0
    %1881 = vmatprep.mubr.f32.mxu0 0.0
    %1882 = vmatmul.mubr.f32.gmra.mrb[0].mxu0 %v1810
    %v1883 = vpop.f32.mrb[0].mxu0
    %v1884 = vadd.f32 %v1804, %v1883
    %v1885 = vpop.f32.mrb[0].mxu0
    %1886 = vdwg.mxu0
    %1887 = vst.msk [vmem:[#allocation15] sm:$0xff] %vm150, %v1879
    %1888 = vst.msk [vmem:[#allocation15 + $0x8] sm:$0xff] %vm150, %v1884
    // Predicated region
    $region78: #{tpu_custom_call.1} parent=1 // pred_check
      _
    $region79: #{tpu_custom_call.1} parent=1 // pred_check_branch
      %1890 = sbr.rel (0) target = $region81
    $region80: #{tpu_custom_call.1} parent=1 // pred_region
      %s1892 = ssub.s32 256, 256
      %1893 = vsyncadd [#allocation5], %s1892
      %s1894 = sshll.u32 [#allocation15], 4
      %s1895 = int_to_ptr.vmem [resolvable:$true] %s1894
      %1900 = dma.vmem_to_hbm [thread:$0]  %s1895, 256, %s12, [#allocation5], 128, 128, 8
    $region81: #{tpu_custom_call.1} parent=1 // pred_fallthru
      _
    // Predicated region
    $region82: #{tpu_custom_call.1} parent=1 // pred_check
      _
    $region83: #{tpu_custom_call.1} parent=1 // pred_check_branch
      %1902 = sbr.rel (0) target = $region85
    $region84: #{tpu_custom_call.1} parent=1 // pred_region
      %1903 = dma.done [#allocation5], 256
    $region85: #{tpu_custom_call.1} parent=1 // pred_fallthru
      _
    %1904 = vsyncpa [#allocation4], 1
    %1905 = vsyncpa [#allocation7], 1
    %1906 = vsyncpa [#allocation10], 1
    %1907 = vsyncpa [#allocation13], 1
    %1908 = vsyncpa [#allocation5], 1

</llo_original>
